<compile_context>
chip_gen: v5e
topology: v5e:2x2
jax: 0.10.0
libtpu: 0.0.40
codegen_flags: <defaults>
</compile_context>

<pallas_src>
import functools

import jax
import jax.numpy as jnp
import numpy as np
from jax.experimental import pallas as pl
from jax.experimental.pallas import tpu as pltpu

_LANES = 128
_SUBLANES = 8
# bf16 (TILE_M x 256) patch tile = 1 MiB; double-buffered inputs + f32 epilogue +
# weights stay far below the default scoped-VMEM limit on v5e/v6e/v7x.
_TILE_M_TARGET = 2048


def _round_up(x, m):
    return ((x + m - 1) // m) * m


# ----------------------------------------------------------------------------
# Pallas kernels
# ----------------------------------------------------------------------------
def _matmul_bias_act_kernel(x_ref, w_ref, b_ref, o_ref, *, relu):
    # x: (TILE_M, Kp) bf16, w: (Kp, Np) bf16, b: (1, Np) f32 -> o: (TILE_M, Np) bf16
    acc = jnp.dot(x_ref[...], w_ref[...], preferred_element_type=jnp.float32)
    acc = acc + b_ref[...]                      # bias/ReLU epilogue kept in f32
    if relu:
        acc = jnp.maximum(acc, 0.0)
    o_ref[...] = acc.astype(o_ref.dtype)


def _conv_pool_fc_kernel(p_ref, w3_ref, b3_ref, w4_ref, b4_ref, o_ref, acc_ref,
                         *, inv_hw):
    # p: (B, TILE_HW, Kp) bf16, w3: (Kp, Cp) bf16, b3: (1, Cp) f32,
    # w4: (Cp, S) f32, b4: (1, S) f32, o: (B, S) f32, acc scratch: (B, Cp) f32.
    r = pl.program_id(0)

    @pl.when(r == 0)
    def _init():
        acc_ref[...] = jnp.zeros_like(acc_ref)

    conv = jnp.einsum("bhk,kc->bhc", p_ref[...], w3_ref[...],
                      preferred_element_type=jnp.float32)
    conv = jnp.maximum(conv + b3_ref[...], 0.0)          # bias + ReLU in f32
    acc_ref[...] += jnp.sum(conv, axis=1)                # per-batch channel sums

    @pl.when(r == pl.num_programs(0) - 1)
    def _finalize():
        pooled = acc_ref[...] * inv_hw                   # AdaptiveAvgPool2d(1)
        o_ref[...] = (jnp.dot(pooled, w4_ref[...],
                              preferred_element_type=jnp.float32) + b4_ref[...])


# ----------------------------------------------------------------------------
# Pallas wrappers
# ----------------------------------------------------------------------------
def matmul_bias_act(patches, w_mat, b_row, *, relu, out_dtype=jnp.bfloat16):
    """(M, Kp) @ (Kp, Np) + b, optional ReLU; gridded over M (parallel)."""
    M, K = patches.shape
    K2, N = w_mat.shape
    assert K2 == K and K % _LANES == 0 and N % _LANES == 0

    tile_m = min(_TILE_M_TARGET, _round_up(M, _SUBLANES))
    m_pad = _round_up(M, tile_m)
    if m_pad != M:
        # Zero rows are discarded by the [:M] slice below -> numerics unchanged.
        patches = jnp.pad(patches, ((0, m_pad - M), (0, 0)))

    cost = pl.CostEstimate(
        flops=2 * m_pad * K * N,
        transcendentals=0,
        bytes_accessed=(m_pad * K + K * N + m_pad * N) * 2 + N * 4,
    )
    out = pl.pallas_call(
        functools.partial(_matmul_bias_act_kernel, relu=relu),
        out_shape=jax.ShapeDtypeStruct((m_pad, N), out_dtype),
        grid=(m_pad // tile_m,),
        in_specs=[
            pl.BlockSpec((tile_m, K), lambda i: (i, 0)),
            pl.BlockSpec((K, N), lambda i: (0, 0)),
            pl.BlockSpec((1, N), lambda i: (0, 0)),
        ],
        out_specs=pl.BlockSpec((tile_m, N), lambda i: (i, 0)),
        compiler_params=pltpu.CompilerParams(dimension_semantics=("parallel",)),
        cost_estimate=cost,
    )(patches, w_mat, b_row)
    return out[:M]


def _choose_hw_tile(hw, cap=1024):
    """Spatial-reduction tile: multiple of 8 dividing hw, or hw itself."""
    if hw <= cap:
        return hw
    t = cap - cap % _SUBLANES
    while t >= _SUBLANES:
        if hw % t == 0:
            return t
        t -= _SUBLANES
    return hw


# ----------------------------------------------------------------------------
# Glue: zero-pad + im2col (pure JAX; all compute stays inside Pallas)
# TODO(synk): move im2col into the kernel (halo-DMA an NHWC tile via
# memory_space=pl.ANY + make_async_copy) to remove the kh*kw HBM expansion of
# the host-side im2col — the remaining dominant HBM cost at large resolutions.
# ----------------------------------------------------------------------------
def im2col_nhwc(x, kh, kw, stride, pad):
    """x: (B, H, W, C) -> patches (B*oh*ow, C*kh*kw), PyTorch (C, kh, kw) order."""
    x = jnp.pad(x, ((0, 0), (pad, pad), (pad, pad), (0, 0)))
    B, H, W, C = x.shape
    oh = (H - kh) // stride + 1
    ow = (W - kw) // stride + 1
    cols = []
    for i in range(kh):
        for j in range(kw):
            cols.append(x[:, i:i + stride * oh:stride, j:j + stride * ow:stride, :])
    stacked = jnp.stack(cols, axis=-1)                 # (B, oh, ow, C, kh*kw)
    patches = stacked.reshape(B * oh * ow, C * kh * kw)
    return patches, oh, ow


def conv2d_block(x_nhwc, w_oihw, b, stride, pad, relu):
    """Conv2d (OIHW weights) + bias + optional ReLU via gridded Pallas matmul."""
    B = x_nhwc.shape[0]
    O, I, KH, KW = w_oihw.shape
    patches, oh, ow = im2col_nhwc(x_nhwc, KH, KW, stride, pad)   # bf16
    K = I * KH * KW
    Kp = _round_up(K, _LANES)                 # e.g. conv1: 147 -> 256 (aligned)
    Np = _round_up(O, _LANES)                 # lane-dense (unmasked) stores
    patches = jnp.pad(patches, ((0, 0), (0, Kp - K)))
    w_mat = jnp.pad(w_oihw.reshape(O, K).T.astype(jnp.bfloat16),
                    ((0, Kp - K), (0, Np - O)))
    b_row = jnp.pad(b.astype(jnp.float32), (0, Np - O)).reshape(1, Np)
    out = matmul_bias_act(patches, w_mat, b_row, relu=relu)      # (M, Np) bf16
    return out[:, :O].reshape(B, oh, ow, O)


def conv_pool_fc(x_nhwc, w3, b3, w4, b4):
    """Fused conv3 (k4,s2,p1) + ReLU + AdaptiveAvgPool2d(1) + 1x1 conv."""
    B = x_nhwc.shape[0]
    O3, I3, KH, KW = w3.shape
    S = w4.shape[0]
    patches, oh, ow = im2col_nhwc(x_nhwc, KH, KW, stride=2, pad=1)
    K = I3 * KH * KW
    Kp = _round_up(K, _LANES)
    Cp = _round_up(O3, _LANES)
    HW = oh * ow

    patches = jnp.pad(patches, ((0, 0), (0, Kp - K))).reshape(B, HW, Kp)
    w3_mat = jnp.pad(w3.reshape(O3, K).T.astype(jnp.bfloat16),
                     ((0, Kp - K), (0, Cp - O3)))                 # (Kp, Cp)
    b3_row = jnp.pad(b3.astype(jnp.float32), (0, Cp - O3)).reshape(1, Cp)
    w4_mat = jnp.pad(w4.reshape(S, O3).T.astype(jnp.float32),
                     ((0, Cp - O3), (0, 0)))                      # (Cp, S)
    b4_row = b4.astype(jnp.float32).reshape(1, S)

    tile_hw = _choose_hw_tile(HW)
    n_r = HW // tile_hw
    cost = pl.CostEstimate(
        flops=2 * B * HW * Kp * Cp + 2 * B * Cp * S,
        transcendentals=0,
        bytes_accessed=(B * HW * Kp + Kp * Cp) * 2 + (Cp + Cp * S + S + B * S) * 4,
    )
    return pl.pallas_call(
        functools.partial(_conv_pool_fc_kernel, inv_hw=1.0 / HW),
        out_shape=jax.ShapeDtypeStruct((B, S), jnp.float32),
        grid=(n_r,),
        in_specs=[
            pl.BlockSpec((B, tile_hw, Kp), lambda r: (0, r, 0)),
            pl.BlockSpec((Kp, Cp), lambda r: (0, 0)),
            pl.BlockSpec((1, Cp), lambda r: (0, 0)),
            pl.BlockSpec((Cp, S), lambda r: (0, 0)),
            pl.BlockSpec((1, S), lambda r: (0, 0)),
        ],
        out_specs=pl.BlockSpec((B, S), lambda r: (0, 0)),
        scratch_shapes=[pltpu.VMEM((B, Cp), jnp.float32)],
        compiler_params=pltpu.CompilerParams(dimension_semantics=("arbitrary",)),
        cost_estimate=cost,
    )(patches, w3_mat, b3_row, w4_mat, b4_row)


# ----------------------------------------------------------------------------
# StyleEncoder forward
# ----------------------------------------------------------------------------
def init_params(key, input_dim=3, dim=8, style_dim=8):
    ks = jax.random.split(key, 8)
    s = 0.05
    return {
        "w1": jax.random.normal(ks[0], (dim, input_dim, 7, 7), jnp.float32) * s,
        "b1": jax.random.normal(ks[1], (dim,), jnp.float32) * s,
        "w2": jax.random.normal(ks[2], (2 * dim, dim, 4, 4), jnp.float32) * s,
        "b2": jax.random.normal(ks[3], (2 * dim,), jnp.float32) * s,
        "w3": jax.random.normal(ks[4], (4 * dim, 2 * dim, 4, 4), jnp.float32) * s,
        "b3": jax.random.normal(ks[5], (4 * dim,), jnp.float32) * s,
        "w4": jax.random.normal(ks[6], (style_dim, 4 * dim, 1, 1), jnp.float32) * s,
        "b4": jax.random.normal(ks[7], (style_dim,), jnp.float32) * s,
    }


def style_encoder_forward(x_nchw, params):
    # External layout NCHW (PyTorch); internal compute NHWC, bf16 activations.
    x = jnp.transpose(x_nchw, (0, 2, 3, 1)).astype(jnp.bfloat16)
    x = conv2d_block(x, params["w1"], params["b1"], stride=1, pad=3, relu=True)
    x = conv2d_block(x, params["w2"], params["b2"], stride=2, pad=1, relu=True)
    out = conv_pool_fc(x, params["w3"], params["b3"], params["w4"], params["b4"])
    return out.reshape(out.shape[0], -1, 1, 1)            # (B, style_dim, 1, 1)


# ----------------------------------------------------------------------------
# Pure-JAX reference mirroring the kernel's precision policy
# (bf16 MXU operands, f32 accumulate, f32 bias/ReLU, bf16 activation storage,
#  f32 pool + final 1x1) — used only for the correctness check.
# ----------------------------------------------------------------------------
def _ref_conv(x_nchw, w, b, stride, pad, relu):
    y = jax.lax.conv_general_dilated(
        x_nchw.astype(jnp.bfloat16), w.astype(jnp.bfloat16),
        window_strides=(stride, stride),
        padding=[(pad, pad), (pad, pad)],
        dimension_numbers=("NCHW", "OIHW", "NCHW"),
        preferred_element_type=jnp.float32,
    ) + b.reshape(1, -1, 1, 1)
    return jnp.maximum(y, 0.0) if relu else y


def style_encoder_reference(x_nchw, params):
    x = x_nchw.astype(jnp.float32)
    x = _ref_conv(x, params["w1"], params["b1"], 1, 3, True)
    x = x.astype(jnp.bfloat16).astype(jnp.float32)
    x = _ref_conv(x, params["w2"], params["b2"], 2, 1, True)
    x = x.astype(jnp.bfloat16).astype(jnp.float32)
    x = _ref_conv(x, params["w3"], params["b3"], 2, 1, True)
    pooled = jnp.mean(x, axis=(2, 3))                                # (B, C)
    w4 = params["w4"].reshape(params["w4"].shape[0], -1)             # (S, C)
    out = pooled @ w4.T + params["b4"]
    return out.reshape(out.shape[0], -1, 1, 1)


if __name__ == "__main__":
    key = jax.random.PRNGKey(0)
    k_in, k_par = jax.random.split(key)
    # Small shapes consistent with the module config: batch=2, channels=3, 16x16.
    x = jax.random.normal(k_in, (2, 3, 16, 16), jnp.float32)
    params = init_params(k_par, input_dim=3, dim=8, style_dim=8)

    fwd = jax.jit(style_encoder_forward)
    out = jax.block_until_ready(fwd(x, params))
    ref = jax.block_until_ready(style_encoder_reference(x, params))

    assert out.shape == (2, 8, 1, 1), out.shape
    np.testing.assert_allclose(np.asarray(out), np.asarray(ref),
                               rtol=1e-2, atol=1e-3)
    print("KERNEL_OK")
</pallas_src>

<mosaic_0001>
module attributes {stable_mosaic.version = 11 : i64} {
  func.func @_matmul_bias_act_kernel(%arg0: i32, %arg1: memref<512x256xbf16, #tpu.memory_space<vmem>>, %arg2: memref<256x128xbf16, #tpu.memory_space<vmem>>, %arg3: memref<1x128xf32, #tpu.memory_space<vmem>>, %arg4: memref<512x128xbf16, #tpu.memory_space<vmem>>) attributes {dimension_semantics = [#tpu.dimension_semantics<parallel>], iteration_bounds = array<i64: 1>, scalar_prefetch = 0 : i64, scratch_operands = 0 : i64, tpu.core_type = #tpu.core_type<tc>, window_params = [{transform_indices = @transform_0, window_bounds = array<i64: 512, 256>}, {pipeline_mode = #tpu.pipeline_mode<synchronous>, transform_indices = @transform_1, window_bounds = array<i64: 256, 128>}, {pipeline_mode = #tpu.pipeline_mode<synchronous>, transform_indices = @transform_2, window_bounds = array<i64: 1, 128>}, {transform_indices = @transform_3, window_bounds = array<i64: 512, 128>}]} {
    %c0 = arith.constant 0 : index
    %c0_0 = arith.constant 0 : index
    %0 = vector.load %arg1[%c0, %c0_0] : memref<512x256xbf16, #tpu.memory_space<vmem>>, vector<512x256xbf16>
    %c0_1 = arith.constant 0 : index
    %c0_2 = arith.constant 0 : index
    %1 = vector.load %arg2[%c0_1, %c0_2] : memref<256x128xbf16, #tpu.memory_space<vmem>>, vector<256x128xbf16>
    %cst = arith.constant dense<0.000000e+00> : vector<512x128xf32>
    %2 = tpu.matmul %0, %1, %cst {dimension_numbers = #tpu.dot_dimension_numbers<[1], [0], [0], [1], [0, 0, 1, 1], [], []>} : vector<512x256xbf16>, vector<256x128xbf16>, vector<512x128xf32> -> vector<512x128xf32>
    %c0_3 = arith.constant 0 : index
    %c0_4 = arith.constant 0 : index
    %3 = vector.load %arg3[%c0_3, %c0_4] : memref<1x128xf32, #tpu.memory_space<vmem>>, vector<1x128xf32>
    %4 = vector.broadcast %3 : vector<1x128xf32> to vector<512x128xf32>
    %5 = arith.addf %2, %4 : vector<512x128xf32>
    %cst_5 = arith.constant 0.000000e+00 : f32
    %6 = vector.broadcast %cst_5 : f32 to vector<512x128xf32>
    %7 = arith.maximumf %5, %6 : vector<512x128xf32>
    %8 = arith.truncf %7 : vector<512x128xf32> to vector<512x128xbf16>
    %c0_6 = arith.constant 0 : index
    %c0_7 = arith.constant 0 : index
    %9 = vector.load %arg4[%c0_6, %c0_7] : memref<512x128xbf16, #tpu.memory_space<vmem>>, vector<512x128xbf16>
    tpu.vector_store %arg4[%c0_6, %c0_7], %8 {strides = array<i32>} : memref<512x128xbf16, #tpu.memory_space<vmem>>, vector<512x128xbf16>,
    return
  }
  func.func @transform_0(%arg0: i32) -> (i32, i32) {
    %c0_i32 = arith.constant 0 : i32
    %c0_i32_0 = arith.constant 0 : i32
    return %arg0, %c0_i32 : i32, i32
  }
  func.func @transform_1(%arg0: i32) -> (i32, i32) {
    %c0_i32 = arith.constant 0 : i32
    %c0_i32_0 = arith.constant 0 : i32
    %c0_i32_1 = arith.constant 0 : i32
    return %c0_i32, %c0_i32_0 : i32, i32
  }
  func.func @transform_2(%arg0: i32) -> (i32, i32) {
    %c0_i32 = arith.constant 0 : i32
    %c0_i32_0 = arith.constant 0 : i32
    %c0_i32_1 = arith.constant 0 : i32
    return %c0_i32, %c0_i32_0 : i32, i32
  }
  func.func @transform_3(%arg0: i32) -> (i32, i32) {
    %c0_i32 = arith.constant 0 : i32
    %c0_i32_0 = arith.constant 0 : i32
    return %arg0, %c0_i32 : i32, i32
  }
}

module attributes {stable_mosaic.version = 11 : i64} {
  func.func @_matmul_bias_act_kernel(%arg0: i32, %arg1: memref<128x128xbf16, #tpu.memory_space<vmem>>, %arg2: memref<128x128xbf16, #tpu.memory_space<vmem>>, %arg3: memref<1x128xf32, #tpu.memory_space<vmem>>, %arg4: memref<128x128xbf16, #tpu.memory_space<vmem>>) attributes {dimension_semantics = [#tpu.dimension_semantics<parallel>], iteration_bounds = array<i64: 1>, scalar_prefetch = 0 : i64, scratch_operands = 0 : i64, tpu.core_type = #tpu.core_type<tc>, window_params = [{transform_indices = @transform_0, window_bounds = array<i64: 128, 128>}, {pipeline_mode = #tpu.pipeline_mode<synchronous>, transform_indices = @transform_1, window_bounds = array<i64: 128, 128>}, {pipeline_mode = #tpu.pipeline_mode<synchronous>, transform_indices = @transform_2, window_bounds = array<i64: 1, 128>}, {transform_indices = @transform_3, window_bounds = array<i64: 128, 128>}]} {
    %c0 = arith.constant 0 : index
    %c0_0 = arith.constant 0 : index
    %0 = vector.load %arg1[%c0, %c0_0] : memref<128x128xbf16, #tpu.memory_space<vmem>>, vector<128x128xbf16>
    %c0_1 = arith.constant 0 : index
    %c0_2 = arith.constant 0 : index
    %1 = vector.load %arg2[%c0_1, %c0_2] : memref<128x128xbf16, #tpu.memory_space<vmem>>, vector<128x128xbf16>
    %cst = arith.constant dense<0.000000e+00> : vector<128x128xf32>
    %2 = tpu.matmul %0, %1, %cst {dimension_numbers = #tpu.dot_dimension_numbers<[1], [0], [0], [1], [0, 0, 1, 1], [], []>} : vector<128x128xbf16>, vector<128x128xbf16>, vector<128x128xf32> -> vector<128x128xf32>
    %c0_3 = arith.constant 0 : index
    %c0_4 = arith.constant 0 : index
    %3 = vector.load %arg3[%c0_3, %c0_4] : memref<1x128xf32, #tpu.memory_space<vmem>>, vector<1x128xf32>
    %4 = vector.broadcast %3 : vector<1x128xf32> to vector<128x128xf32>
    %5 = arith.addf %2, %4 : vector<128x128xf32>
    %cst_5 = arith.constant 0.000000e+00 : f32
    %6 = vector.broadcast %cst_5 : f32 to vector<128x128xf32>
    %7 = arith.maximumf %5, %6 : vector<128x128xf32>
    %8 = arith.truncf %7 : vector<128x128xf32> to vector<128x128xbf16>
    %c0_6 = arith.constant 0 : index
    %c0_7 = arith.constant 0 : index
    %9 = vector.load %arg4[%c0_6, %c0_7] : memref<128x128xbf16, #tpu.memory_space<vmem>>, vector<128x128xbf16>
    tpu.vector_store %arg4[%c0_6, %c0_7], %8 {strides = array<i32>} : memref<128x128xbf16, #tpu.memory_space<vmem>>, vector<128x128xbf16>,
    return
  }
  func.func @transform_0(%arg0: i32) -> (i32, i32) {
    %c0_i32 = arith.constant 0 : i32
    %c0_i32_0 = arith.constant 0 : i32
    return %arg0, %c0_i32 : i32, i32
  }
  func.func @transform_1(%arg0: i32) -> (i32, i32) {
    %c0_i32 = arith.constant 0 : i32
    %c0_i32_0 = arith.constant 0 : i32
    %c0_i32_1 = arith.constant 0 : i32
    return %c0_i32, %c0_i32_0 : i32, i32
  }
  func.func @transform_2(%arg0: i32) -> (i32, i32) {
    %c0_i32 = arith.constant 0 : i32
    %c0_i32_0 = arith.constant 0 : i32
    %c0_i32_1 = arith.constant 0 : i32
    return %c0_i32, %c0_i32_0 : i32, i32
  }
  func.func @transform_3(%arg0: i32) -> (i32, i32) {
    %c0_i32 = arith.constant 0 : i32
    %c0_i32_0 = arith.constant 0 : i32
    return %arg0, %c0_i32 : i32, i32
  }
}

module attributes {stable_mosaic.version = 11 : i64} {
  func.func @_conv_pool_fc_kernel(%arg0: i32, %arg1: memref<2x16x256xbf16, #tpu.memory_space<vmem>>, %arg2: memref<256x128xbf16, #tpu.memory_space<vmem>>, %arg3: memref<1x128xf32, #tpu.memory_space<vmem>>, %arg4: memref<128x8xf32, #tpu.memory_space<vmem>>, %arg5: memref<1x8xf32, #tpu.memory_space<vmem>>, %arg6: memref<2x8xf32, #tpu.memory_space<vmem>>, %arg7: memref<2x128xf32, #tpu.memory_space<vmem>>) attributes {dimension_semantics = [#tpu.dimension_semantics<arbitrary>], iteration_bounds = array<i64: 1>, scalar_prefetch = 0 : i64, scratch_operands = 1 : i64, tpu.core_type = #tpu.core_type<tc>, window_params = [{transform_indices = @transform_0, window_bounds = array<i64: 2, 16, 256>}, {pipeline_mode = #tpu.pipeline_mode<synchronous>, transform_indices = @transform_1, window_bounds = array<i64: 256, 128>}, {pipeline_mode = #tpu.pipeline_mode<synchronous>, transform_indices = @transform_2, window_bounds = array<i64: 1, 128>}, {pipeline_mode = #tpu.pipeline_mode<synchronous>, transform_indices = @transform_3, window_bounds = array<i64: 128, 8>}, {pipeline_mode = #tpu.pipeline_mode<synchronous>, transform_indices = @transform_4, window_bounds = array<i64: 1, 8>}, {pipeline_mode = #tpu.pipeline_mode<synchronous>, transform_indices = @transform_5, window_bounds = array<i64: 2, 8>}]} {
    %c0_i32 = arith.constant 0 : i32
    %0 = arith.cmpi eq, %arg0, %c0_i32 : i32
    %1 = arith.extui %0 : i1 to i32
    %c0_i32_0 = arith.constant 0 : i32
    %2 = arith.cmpi ne, %1, %c0_i32_0 : i32
    scf.if %2 {
      %cst_15 = arith.constant 0.000000e+00 : f32
      %19 = vector.broadcast %cst_15 : f32 to vector<2x128xf32>
      %c0_16 = arith.constant 0 : index
      %c0_17 = arith.constant 0 : index
      %20 = vector.load %arg7[%c0_16, %c0_17] : memref<2x128xf32, #tpu.memory_space<vmem>>, vector<2x128xf32>
      tpu.vector_store %arg7[%c0_16, %c0_17], %19 {strides = array<i32>} : memref<2x128xf32, #tpu.memory_space<vmem>>, vector<2x128xf32>,
    } else {
    }
    %c0 = arith.constant 0 : index
    %c0_1 = arith.constant 0 : index
    %c0_2 = arith.constant 0 : index
    %3 = vector.load %arg1[%c0, %c0_1, %c0_2] : memref<2x16x256xbf16, #tpu.memory_space<vmem>>, vector<2x16x256xbf16>
    %c0_3 = arith.constant 0 : index
    %c0_4 = arith.constant 0 : index
    %4 = vector.load %arg2[%c0_3, %c0_4] : memref<256x128xbf16, #tpu.memory_space<vmem>>, vector<256x128xbf16>
    "tpu.trace_start"() <{level = 10 : i32, message = "bhk,kc->bhc"}> : () -> ()
    %cst = arith.constant dense<0.000000e+00> : vector<2x16x128xf32>
    %5 = tpu.matmul %3, %4, %cst {dimension_numbers = #tpu.dot_dimension_numbers<[2], [0], [0, 1], [1], [0, 0, 0, 1, 1, 1], [], []>} : vector<2x16x256xbf16>, vector<256x128xbf16>, vector<2x16x128xf32> -> vector<2x16x128xf32>
    "tpu.trace_stop"() : () -> ()
    %c0_5 = arith.constant 0 : index
    %c0_6 = arith.constant 0 : index
    %6 = vector.load %arg3[%c0_5, %c0_6] : memref<1x128xf32, #tpu.memory_space<vmem>>, vector<1x128xf32>
    %7 = vector.shape_cast %6 : vector<1x128xf32> to vector<1x1x128xf32>
    %8 = vector.broadcast %7 : vector<1x1x128xf32> to vector<2x16x128xf32>
    %9 = arith.addf %5, %8 : vector<2x16x128xf32>
    %cst_7 = arith.constant 0.000000e+00 : f32
    %10 = vector.broadcast %cst_7 : f32 to vector<2x16x128xf32>
    %11 = arith.maximumf %9, %10 : vector<2x16x128xf32>
    %c0_8 = arith.constant 0 : index
    %c0_9 = arith.constant 0 : index
    %12 = vector.load %arg7[%c0_8, %c0_9] : memref<2x128xf32, #tpu.memory_space<vmem>>, vector<2x128xf32>
    %cst_10 = arith.constant dense<0.000000e+00> : vector<2x128xf32>
    %13 = vector.multi_reduction <add>, %11, %cst_10 [1] : vector<2x16x128xf32> to vector<2x128xf32>
    %14 = arith.addf %12, %13 : vector<2x128xf32>
    %c0_11 = arith.constant 0 : index
    %c0_12 = arith.constant 0 : index
    %15 = vector.load %arg7[%c0_11, %c0_12] : memref<2x128xf32, #tpu.memory_space<vmem>>, vector<2x128xf32>
    tpu.vector_store %arg7[%c0_11, %c0_12], %14 {strides = array<i32>} : memref<2x128xf32, #tpu.memory_space<vmem>>, vector<2x128xf32>,
    %c0_i32_13 = arith.constant 0 : i32
    %16 = arith.cmpi eq, %arg0, %c0_i32_13 : i32
    %17 = arith.extui %16 : i1 to i32
    %c0_i32_14 = arith.constant 0 : i32
    %18 = arith.cmpi ne, %17, %c0_i32_14 : i32
    scf.if %18 {
      %c0_15 = arith.constant 0 : index
      %c0_16 = arith.constant 0 : index
      %19 = vector.load %arg7[%c0_15, %c0_16] : memref<2x128xf32, #tpu.memory_space<vmem>>, vector<2x128xf32>
      %cst_17 = arith.constant 6.250000e-02 : f32
      %20 = vector.broadcast %cst_17 : f32 to vector<2x128xf32>
      %21 = arith.mulf %19, %20 : vector<2x128xf32>
      %c0_18 = arith.constant 0 : index
      %c0_19 = arith.constant 0 : index
      %22 = vector.load %arg4[%c0_18, %c0_19] : memref<128x8xf32, #tpu.memory_space<vmem>>, vector<128x8xf32>
      %cst_20 = arith.constant dense<0.000000e+00> : vector<2x8xf32>
      %23 = tpu.matmul %21, %22, %cst_20 {dimension_numbers = #tpu.dot_dimension_numbers<[1], [0], [0], [1], [0, 0, 1, 1], [], []>} : vector<2x128xf32>, vector<128x8xf32>, vector<2x8xf32> -> vector<2x8xf32>
      %c0_21 = arith.constant 0 : index
      %c0_22 = arith.constant 0 : index
      %24 = vector.load %arg5[%c0_21, %c0_22] : memref<1x8xf32, #tpu.memory_space<vmem>>, vector<1x8xf32>
      %25 = vector.broadcast %24 : vector<1x8xf32> to vector<2x8xf32>
      %26 = arith.addf %23, %25 : vector<2x8xf32>
      %c0_23 = arith.constant 0 : index
      %c0_24 = arith.constant 0 : index
      %27 = vector.load %arg6[%c0_23, %c0_24] : memref<2x8xf32, #tpu.memory_space<vmem>>, vector<2x8xf32>
      tpu.vector_store %arg6[%c0_23, %c0_24], %26 {strides = array<i32>} : memref<2x8xf32, #tpu.memory_space<vmem>>, vector<2x8xf32>,
    } else {
    }
    return
  }
  func.func @transform_0(%arg0: i32) -> (i32, i32, i32) {
    %c0_i32 = arith.constant 0 : i32
    %c0_i32_0 = arith.constant 0 : i32
    %c0_i32_1 = arith.constant 0 : i32
    return %c0_i32, %arg0, %c0_i32_0 : i32, i32, i32
  }
  func.func @transform_1(%arg0: i32) -> (i32, i32) {
    %c0_i32 = arith.constant 0 : i32
    %c0_i32_0 = arith.constant 0 : i32
    %c0_i32_1 = arith.constant 0 : i32
    return %c0_i32, %c0_i32_0 : i32, i32
  }
  func.func @transform_2(%arg0: i32) -> (i32, i32) {
    %c0_i32 = arith.constant 0 : i32
    %c0_i32_0 = arith.constant 0 : i32
    %c0_i32_1 = arith.constant 0 : i32
    return %c0_i32, %c0_i32_0 : i32, i32
  }
  func.func @transform_3(%arg0: i32) -> (i32, i32) {
    %c0_i32 = arith.constant 0 : i32
    %c0_i32_0 = arith.constant 0 : i32
    %c0_i32_1 = arith.constant 0 : i32
    return %c0_i32, %c0_i32_0 : i32, i32
  }
  func.func @transform_4(%arg0: i32) -> (i32, i32) {
    %c0_i32 = arith.constant 0 : i32
    %c0_i32_0 = arith.constant 0 : i32
    %c0_i32_1 = arith.constant 0 : i32
    return %c0_i32, %c0_i32_0 : i32, i32
  }
  func.func @transform_5(%arg0: i32) -> (i32, i32) {
    %c0_i32 = arith.constant 0 : i32
    %c0_i32_0 = arith.constant 0 : i32
    %c0_i32_1 = arith.constant 0 : i32
    return %c0_i32, %c0_i32_0 : i32, i32
  }
}

</mosaic_0001>

<llo_original>
// kernel: style_encoder_forward.3
$region0: #{style_encoder_forward.3}
  #allocation0 [shape = 'u32[]', space=smem, size = 0x4, offset = 0x4, fixed_abs, tag = 'smem constant byte address 0x4 - core index']
  #allocation1 [shape = 'u32[72,128]{1,0:T(1,128)}', space=vmem, size = 0x9000, scoped, tag = 'internal scratch']
  %s0 = inlined_call_operand.vmem [shape: bf16[512,256], index: 0, kind: input, shape index: {}]
  %s1 = inlined_call_operand.vmem [shape: bf16[256,128], index: 1, kind: input, shape index: {}]
  %s2 = inlined_call_operand.vmem [shape: f32[1,128], index: 2, kind: input, shape index: {}]
  %s3 = inlined_call_operand.vmem [shape: bf16[512,128], index: 3, kind: output, shape index: {}]
  %s4 = sld [smem:[#allocation0]]
  $region22: #{style_encoder_forward.3} parent=0
    _
  %s6 = ssub.s32 1, %s4
  %s7 = scalar_select 0, %s6, %s4
  // Predicated region
  $region2: #{style_encoder_forward.3} parent=0 // pred_check
    _
  $region3: #{style_encoder_forward.3} parent=0 // pred_check_branch
    %9 = sbr.rel (0) target = $region5
  $region4: #{style_encoder_forward.3} parent=0 // pred_region
    _
  $region5: #{style_encoder_forward.3} parent=0 // pred_fallthru
    _
  // Predicated region
  $region6: #{style_encoder_forward.3} parent=0 // pred_check
    _
  $region7: #{style_encoder_forward.3} parent=0 // pred_check_branch
    %11 = sbr.rel (0) target = $region9
  $region8: #{style_encoder_forward.3} parent=0 // pred_region
    _
  $region9: #{style_encoder_forward.3} parent=0 // pred_fallthru
    _
  // Predicated region
  $region10: #{style_encoder_forward.3} parent=0 // pred_check
    _
  $region11: #{style_encoder_forward.3} parent=0 // pred_check_branch
    %13 = sbr.rel (0) target = $region13
  $region12: #{style_encoder_forward.3} parent=0 // pred_region
    _
  $region13: #{style_encoder_forward.3} parent=0 // pred_fallthru
    _
  %v14 = vld [vmem:[%s0] sm:$0xff]
  %v15 = vld [vmem:[%s0 + $0x8] sm:$0xff]
  %v16 = vld [vmem:[%s0 + $0x10] sm:$0xff]
  %v17 = vld [vmem:[%s0 + $0x18] sm:$0xff]
  %v18 = vld [vmem:[%s0 + $0x20] sm:$0xff]
  %v19 = vld [vmem:[%s0 + $0x28] sm:$0xff]
  %v20 = vld [vmem:[%s0 + $0x30] sm:$0xff]
  %v21 = vld [vmem:[%s0 + $0x38] sm:$0xff]
  %v22 = vld [vmem:[%s0 + $0x40] sm:$0xff]
  %v23 = vld [vmem:[%s0 + $0x48] sm:$0xff]
  %v24 = vld [vmem:[%s0 + $0x50] sm:$0xff]
  %v25 = vld [vmem:[%s0 + $0x58] sm:$0xff]
  %v26 = vld [vmem:[%s0 + $0x60] sm:$0xff]
  %v27 = vld [vmem:[%s0 + $0x68] sm:$0xff]
  %v28 = vld [vmem:[%s0 + $0x70] sm:$0xff]
  %v29 = vld [vmem:[%s0 + $0x78] sm:$0xff]
  %v30 = vld [vmem:[%s0 + $0x80] sm:$0xff]
  %v31 = vld [vmem:[%s0 + $0x88] sm:$0xff]
  %v32 = vld [vmem:[%s0 + $0x90] sm:$0xff]
  %v33 = vld [vmem:[%s0 + $0x98] sm:$0xff]
  %v34 = vld [vmem:[%s0 + $0xa0] sm:$0xff]
  %v35 = vld [vmem:[%s0 + $0xa8] sm:$0xff]
  %v36 = vld [vmem:[%s0 + $0xb0] sm:$0xff]
  %v37 = vld [vmem:[%s0 + $0xb8] sm:$0xff]
  %v38 = vld [vmem:[%s0 + $0xc0] sm:$0xff]
  %v39 = vld [vmem:[%s0 + $0xc8] sm:$0xff]
  %v40 = vld [vmem:[%s0 + $0xd0] sm:$0xff]
  %v41 = vld [vmem:[%s0 + $0xd8] sm:$0xff]
  %v42 = vld [vmem:[%s0 + $0xe0] sm:$0xff]
  %v43 = vld [vmem:[%s0 + $0xe8] sm:$0xff]
  %v44 = vld [vmem:[%s0 + $0xf0] sm:$0xff]
  %v45 = vld [vmem:[%s0 + $0xf8] sm:$0xff]
  %v46 = vld [vmem:[%s0 + $0x100] sm:$0xff]
  %v47 = vld [vmem:[%s0 + $0x108] sm:$0xff]
  %v48 = vld [vmem:[%s0 + $0x110] sm:$0xff]
  %v49 = vld [vmem:[%s0 + $0x118] sm:$0xff]
  %v50 = vld [vmem:[%s0 + $0x120] sm:$0xff]
  %v51 = vld [vmem:[%s0 + $0x128] sm:$0xff]
  %v52 = vld [vmem:[%s0 + $0x130] sm:$0xff]
  %v53 = vld [vmem:[%s0 + $0x138] sm:$0xff]
  %v54 = vld [vmem:[%s0 + $0x140] sm:$0xff]
  %v55 = vld [vmem:[%s0 + $0x148] sm:$0xff]
  %v56 = vld [vmem:[%s0 + $0x150] sm:$0xff]
  %v57 = vld [vmem:[%s0 + $0x158] sm:$0xff]
  %v58 = vld [vmem:[%s0 + $0x160] sm:$0xff]
  %v59 = vld [vmem:[%s0 + $0x168] sm:$0xff]
  %v60 = vld [vmem:[%s0 + $0x170] sm:$0xff]
  %v61 = vld [vmem:[%s0 + $0x178] sm:$0xff]
  %v62 = vld [vmem:[%s0 + $0x180] sm:$0xff]
  %v63 = vld [vmem:[%s0 + $0x188] sm:$0xff]
  %v64 = vld [vmem:[%s0 + $0x190] sm:$0xff]
  %v65 = vld [vmem:[%s0 + $0x198] sm:$0xff]
  %v66 = vld [vmem:[%s0 + $0x1a0] sm:$0xff]
  %v67 = vld [vmem:[%s0 + $0x1a8] sm:$0xff]
  %v68 = vld [vmem:[%s0 + $0x1b0] sm:$0xff]
  %v69 = vld [vmem:[%s0 + $0x1b8] sm:$0xff]
  %v70 = vld [vmem:[%s0 + $0x1c0] sm:$0xff]
  %v71 = vld [vmem:[%s0 + $0x1c8] sm:$0xff]
  %v72 = vld [vmem:[%s0 + $0x1d0] sm:$0xff]
  %v73 = vld [vmem:[%s0 + $0x1d8] sm:$0xff]
  %v74 = vld [vmem:[%s0 + $0x1e0] sm:$0xff]
  %v75 = vld [vmem:[%s0 + $0x1e8] sm:$0xff]
  %v76 = vld [vmem:[%s0 + $0x1f0] sm:$0xff]
  %v77 = vld [vmem:[%s0 + $0x1f8] sm:$0xff]
  %v78 = vld [vmem:[%s1] sm:$0xf]
  %v79 = vld [vmem:[%s1 + $0x4] sm:$0xf]
  %v80 = vld [vmem:[%s1 + $0x8] sm:$0xf]
  %v81 = vld [vmem:[%s1 + $0xc] sm:$0xf]
  %v82 = vld [vmem:[%s1 + $0x10] sm:$0xf]
  %v83 = vld [vmem:[%s1 + $0x14] sm:$0xf]
  %v84 = vld [vmem:[%s1 + $0x18] sm:$0xf]
  %v85 = vld [vmem:[%s1 + $0x1c] sm:$0xf]
  %v86 = vld [vmem:[%s1 + $0x20] sm:$0xf]
  %v87 = vld [vmem:[%s1 + $0x24] sm:$0xf]
  %v88 = vld [vmem:[%s1 + $0x28] sm:$0xf]
  %v89 = vld [vmem:[%s1 + $0x2c] sm:$0xf]
  %v90 = vld [vmem:[%s1 + $0x30] sm:$0xf]
  %v91 = vld [vmem:[%s1 + $0x34] sm:$0xf]
  %v92 = vld [vmem:[%s1 + $0x38] sm:$0xf]
  %v93 = vld [vmem:[%s1 + $0x3c] sm:$0xf]
  %v94 = vld [vmem:[%s1 + $0x40] sm:$0xf]
  %v95 = vld [vmem:[%s1 + $0x44] sm:$0xf]
  %v96 = vld [vmem:[%s1 + $0x48] sm:$0xf]
  %v97 = vld [vmem:[%s1 + $0x4c] sm:$0xf]
  %v98 = vld [vmem:[%s1 + $0x50] sm:$0xf]
  %v99 = vld [vmem:[%s1 + $0x54] sm:$0xf]
  %v100 = vld [vmem:[%s1 + $0x58] sm:$0xf]
  %v101 = vld [vmem:[%s1 + $0x5c] sm:$0xf]
  %v102 = vld [vmem:[%s1 + $0x60] sm:$0xf]
  %v103 = vld [vmem:[%s1 + $0x64] sm:$0xf]
  %v104 = vld [vmem:[%s1 + $0x68] sm:$0xf]
  %v105 = vld [vmem:[%s1 + $0x6c] sm:$0xf]
  %v106 = vld [vmem:[%s1 + $0x70] sm:$0xf]
  %v107 = vld [vmem:[%s1 + $0x74] sm:$0xf]
  %v108 = vld [vmem:[%s1 + $0x78] sm:$0xf]
  %v109 = vld [vmem:[%s1 + $0x7c] sm:$0xf]
  %v110 = vld [vmem:[%s2] sm:$0x1]
  %v112 = vperm.slane %v110, 0
  %v178 = vunpack.c.l.b16 %v14
  %v179 = vunpack.c.h.b16 %v14
  %v180 = vunpack.c.l.b16 %v15
  %v181 = vunpack.c.h.b16 %v15
  %v182 = vunpack.c.l.b16 %v16
  %v183 = vunpack.c.h.b16 %v16
  %v184 = vunpack.c.l.b16 %v17
  %v185 = vunpack.c.h.b16 %v17
  %v186 = vunpack.c.l.b16 %v18
  %v187 = vunpack.c.h.b16 %v18
  %v188 = vunpack.c.l.b16 %v19
  %v189 = vunpack.c.h.b16 %v19
  %v190 = vunpack.c.l.b16 %v20
  %v191 = vunpack.c.h.b16 %v20
  %v192 = vunpack.c.l.b16 %v21
  %v193 = vunpack.c.h.b16 %v21
  %v194 = vunpack.c.l.b16 %v22
  %v195 = vunpack.c.h.b16 %v22
  %v196 = vunpack.c.l.b16 %v23
  %v197 = vunpack.c.h.b16 %v23
  %v198 = vunpack.c.l.b16 %v24
  %v199 = vunpack.c.h.b16 %v24
  %v200 = vunpack.c.l.b16 %v25
  %v201 = vunpack.c.h.b16 %v25
  %v202 = vunpack.c.l.b16 %v26
  %v203 = vunpack.c.h.b16 %v26
  %v204 = vunpack.c.l.b16 %v27
  %v205 = vunpack.c.h.b16 %v27
  %v206 = vunpack.c.l.b16 %v28
  %v207 = vunpack.c.h.b16 %v28
  %v208 = vunpack.c.l.b16 %v29
  %v209 = vunpack.c.h.b16 %v29
  %v210 = vunpack.c.l.b16 %v30
  %v211 = vunpack.c.h.b16 %v30
  %v212 = vunpack.c.l.b16 %v31
  %v213 = vunpack.c.h.b16 %v31
  %v214 = vunpack.c.l.b16 %v32
  %v215 = vunpack.c.h.b16 %v32
  %v216 = vunpack.c.l.b16 %v33
  %v217 = vunpack.c.h.b16 %v33
  %v218 = vunpack.c.l.b16 %v34
  %v219 = vunpack.c.h.b16 %v34
  %v220 = vunpack.c.l.b16 %v35
  %v221 = vunpack.c.h.b16 %v35
  %v222 = vunpack.c.l.b16 %v36
  %v223 = vunpack.c.h.b16 %v36
  %v224 = vunpack.c.l.b16 %v37
  %v225 = vunpack.c.h.b16 %v37
  %v226 = vunpack.c.l.b16 %v38
  %v227 = vunpack.c.h.b16 %v38
  %v228 = vunpack.c.l.b16 %v39
  %v229 = vunpack.c.h.b16 %v39
  %v230 = vunpack.c.l.b16 %v40
  %v231 = vunpack.c.h.b16 %v40
  %v232 = vunpack.c.l.b16 %v41
  %v233 = vunpack.c.h.b16 %v41
  %v234 = vunpack.c.l.b16 %v42
  %v235 = vunpack.c.h.b16 %v42
  %v236 = vunpack.c.l.b16 %v43
  %v237 = vunpack.c.h.b16 %v43
  %v238 = vunpack.c.l.b16 %v44
  %v239 = vunpack.c.h.b16 %v44
  %v240 = vunpack.c.l.b16 %v45
  %v241 = vunpack.c.h.b16 %v45
  %v242 = vunpack.c.l.b16 %v46
  %v243 = vunpack.c.h.b16 %v46
  %v244 = vunpack.c.l.b16 %v47
  %v245 = vunpack.c.h.b16 %v47
  %v246 = vunpack.c.l.b16 %v48
  %v247 = vunpack.c.h.b16 %v48
  %v248 = vunpack.c.l.b16 %v49
  %v249 = vunpack.c.h.b16 %v49
  %v250 = vunpack.c.l.b16 %v50
  %v251 = vunpack.c.h.b16 %v50
  %v252 = vunpack.c.l.b16 %v51
  %v253 = vunpack.c.h.b16 %v51
  %v254 = vunpack.c.l.b16 %v52
  %v255 = vunpack.c.h.b16 %v52
  %v256 = vunpack.c.l.b16 %v53
  %v257 = vunpack.c.h.b16 %v53
  %v258 = vunpack.c.l.b16 %v54
  %v259 = vunpack.c.h.b16 %v54
  %v260 = vunpack.c.l.b16 %v55
  %v261 = vunpack.c.h.b16 %v55
  %v262 = vunpack.c.l.b16 %v56
  %v263 = vunpack.c.h.b16 %v56
  %v264 = vunpack.c.l.b16 %v57
  %v265 = vunpack.c.h.b16 %v57
  %v266 = vunpack.c.l.b16 %v58
  %v267 = vunpack.c.h.b16 %v58
  %v268 = vunpack.c.l.b16 %v59
  %v269 = vunpack.c.h.b16 %v59
  %v270 = vunpack.c.l.b16 %v60
  %v271 = vunpack.c.h.b16 %v60
  %v272 = vunpack.c.l.b16 %v61
  %v273 = vunpack.c.h.b16 %v61
  %v274 = vunpack.c.l.b16 %v62
  %v275 = vunpack.c.h.b16 %v62
  %v276 = vunpack.c.l.b16 %v63
  %v277 = vunpack.c.h.b16 %v63
  %v278 = vunpack.c.l.b16 %v64
  %v279 = vunpack.c.h.b16 %v64
  %v280 = vunpack.c.l.b16 %v65
  %v281 = vunpack.c.h.b16 %v65
  %v282 = vunpack.c.l.b16 %v66
  %v283 = vunpack.c.h.b16 %v66
  %v284 = vunpack.c.l.b16 %v67
  %v285 = vunpack.c.h.b16 %v67
  %v286 = vunpack.c.l.b16 %v68
  %v287 = vunpack.c.h.b16 %v68
  %v288 = vunpack.c.l.b16 %v69
  %v289 = vunpack.c.h.b16 %v69
  %v290 = vunpack.c.l.b16 %v70
  %v291 = vunpack.c.h.b16 %v70
  %v292 = vunpack.c.l.b16 %v71
  %v293 = vunpack.c.h.b16 %v71
  %v294 = vunpack.c.l.b16 %v72
  %v295 = vunpack.c.h.b16 %v72
  %v296 = vunpack.c.l.b16 %v73
  %v297 = vunpack.c.h.b16 %v73
  %v298 = vunpack.c.l.b16 %v74
  %v299 = vunpack.c.h.b16 %v74
  %v300 = vunpack.c.l.b16 %v75
  %v301 = vunpack.c.h.b16 %v75
  %v302 = vunpack.c.l.b16 %v76
  %v303 = vunpack.c.h.b16 %v76
  %v304 = vunpack.c.l.b16 %v77
  %v305 = vunpack.c.h.b16 %v77
  %v306 = vpack.c.b16 %v180, %v178
  %v307 = vpack.c.b16 %v181, %v179
  %v308 = vpack.c.b16 %v184, %v182
  %v309 = vpack.c.b16 %v185, %v183
  %v310 = vpack.c.b16 %v188, %v186
  %v311 = vpack.c.b16 %v189, %v187
  %v312 = vpack.c.b16 %v192, %v190
  %v313 = vpack.c.b16 %v193, %v191
  %v314 = vpack.c.b16 %v196, %v194
  %v315 = vpack.c.b16 %v197, %v195
  %v316 = vpack.c.b16 %v200, %v198
  %v317 = vpack.c.b16 %v201, %v199
  %v318 = vpack.c.b16 %v204, %v202
  %v319 = vpack.c.b16 %v205, %v203
  %v320 = vpack.c.b16 %v208, %v206
  %v321 = vpack.c.b16 %v209, %v207
  %v322 = vpack.c.b16 %v212, %v210
  %v323 = vpack.c.b16 %v213, %v211
  %v324 = vpack.c.b16 %v216, %v214
  %v325 = vpack.c.b16 %v217, %v215
  %v326 = vpack.c.b16 %v220, %v218
  %v327 = vpack.c.b16 %v221, %v219
  %v328 = vpack.c.b16 %v224, %v222
  %v329 = vpack.c.b16 %v225, %v223
  %v330 = vpack.c.b16 %v228, %v226
  %v331 = vpack.c.b16 %v229, %v227
  %v332 = vpack.c.b16 %v232, %v230
  %v333 = vpack.c.b16 %v233, %v231
  %v334 = vpack.c.b16 %v236, %v234
  %v335 = vpack.c.b16 %v237, %v235
  %v336 = vpack.c.b16 %v240, %v238
  %v337 = vpack.c.b16 %v241, %v239
  %v338 = vpack.c.b16 %v244, %v242
  %v339 = vpack.c.b16 %v245, %v243
  %v340 = vpack.c.b16 %v248, %v246
  %v341 = vpack.c.b16 %v249, %v247
  %v342 = vpack.c.b16 %v252, %v250
  %v343 = vpack.c.b16 %v253, %v251
  %v344 = vpack.c.b16 %v256, %v254
  %v345 = vpack.c.b16 %v257, %v255
  %v346 = vpack.c.b16 %v260, %v258
  %v347 = vpack.c.b16 %v261, %v259
  %v348 = vpack.c.b16 %v264, %v262
  %v349 = vpack.c.b16 %v265, %v263
  %v350 = vpack.c.b16 %v268, %v266
  %v351 = vpack.c.b16 %v269, %v267
  %v352 = vpack.c.b16 %v272, %v270
  %v353 = vpack.c.b16 %v273, %v271
  %v354 = vpack.c.b16 %v276, %v274
  %v355 = vpack.c.b16 %v277, %v275
  %v356 = vpack.c.b16 %v280, %v278
  %v357 = vpack.c.b16 %v281, %v279
  %v358 = vpack.c.b16 %v284, %v282
  %v359 = vpack.c.b16 %v285, %v283
  %v360 = vpack.c.b16 %v288, %v286
  %v361 = vpack.c.b16 %v289, %v287
  %v362 = vpack.c.b16 %v292, %v290
  %v363 = vpack.c.b16 %v293, %v291
  %v364 = vpack.c.b16 %v296, %v294
  %v365 = vpack.c.b16 %v297, %v295
  %v366 = vpack.c.b16 %v300, %v298
  %v367 = vpack.c.b16 %v301, %v299
  %v368 = vpack.c.b16 %v304, %v302
  %v369 = vpack.c.b16 %v305, %v303
  %v466 = vunpack.c.l.b16 %v78
  %v467 = vunpack.c.l.b16 %v79
  %v468 = vunpack.c.l.b16 %v80
  %v469 = vunpack.c.l.b16 %v81
  %v470 = vunpack.c.l.b16 %v82
  %v471 = vunpack.c.l.b16 %v83
  %v472 = vunpack.c.l.b16 %v84
  %v473 = vunpack.c.l.b16 %v85
  %v474 = vunpack.c.l.b16 %v86
  %v475 = vunpack.c.l.b16 %v87
  %v476 = vunpack.c.l.b16 %v88
  %v477 = vunpack.c.l.b16 %v89
  %v478 = vunpack.c.l.b16 %v90
  %v479 = vunpack.c.l.b16 %v91
  %v480 = vunpack.c.l.b16 %v92
  %v481 = vunpack.c.l.b16 %v93
  %v482 = vunpack.c.l.b16 %v94
  %v483 = vunpack.c.l.b16 %v95
  %v484 = vunpack.c.l.b16 %v96
  %v485 = vunpack.c.l.b16 %v97
  %v486 = vunpack.c.l.b16 %v98
  %v487 = vunpack.c.l.b16 %v99
  %v488 = vunpack.c.l.b16 %v100
  %v489 = vunpack.c.l.b16 %v101
  %v490 = vunpack.c.l.b16 %v102
  %v491 = vunpack.c.l.b16 %v103
  %v492 = vunpack.c.l.b16 %v104
  %v493 = vunpack.c.l.b16 %v105
  %v494 = vunpack.c.l.b16 %v106
  %v495 = vunpack.c.l.b16 %v107
  %v496 = vunpack.c.l.b16 %v108
  %v497 = vunpack.c.l.b16 %v109
  %v498 = vpack.c.b16 %v467, %v466
  %v499 = vpack.c.b16 %v469, %v468
  %v500 = vpack.c.b16 %v471, %v470
  %v501 = vpack.c.b16 %v473, %v472
  %v502 = vpack.c.b16 %v475, %v474
  %v503 = vpack.c.b16 %v477, %v476
  %v504 = vpack.c.b16 %v479, %v478
  %v505 = vpack.c.b16 %v481, %v480
  %v506 = vpack.c.b16 %v483, %v482
  %v507 = vpack.c.b16 %v485, %v484
  %v508 = vpack.c.b16 %v487, %v486
  %v509 = vpack.c.b16 %v489, %v488
  %v510 = vpack.c.b16 %v491, %v490
  %v511 = vpack.c.b16 %v493, %v492
  %v512 = vpack.c.b16 %v495, %v494
  %v513 = vpack.c.b16 %v497, %v496
  %530 = vmatpush.bf16.msra.mxu0 %v505
  %531 = vmatpush.bf16.msra.mxu0 %v504
  %532 = vmatpush.bf16.msra.mxu0 %v503
  %533 = vmatpush.bf16.msra.mxu0 %v502
  %534 = vmatpush.bf16.msra.mxu0 %v501
  %535 = vmatpush.bf16.msra.mxu0 %v500
  %536 = vmatpush.bf16.msra.mxu0 %v499
  %537 = vmatpush.bf16.msra.mxu0 %v498
  %538 = vmatmul.bf16.gmra.mxu0 %v306
  %v539 = vpop.f32.mrf.mxu0
  %v540 = vadd.f32 %v112, %v539
  %v541 = vpop.f32.mrf.mxu0
  %v542 = vadd.f32 %v112, %v541
  %543 = vmatmul.bf16.gmra.mxu0 %v308
  %v544 = vpop.f32.mrf.mxu0
  %v545 = vadd.f32 %v112, %v544
  %v546 = vpop.f32.mrf.mxu0
  %v547 = vadd.f32 %v112, %v546
  %548 = vmatmul.bf16.gmra.mxu0 %v310
  %v549 = vpop.f32.mrf.mxu0
  %v550 = vadd.f32 %v112, %v549
  %v551 = vpop.f32.mrf.mxu0
  %v552 = vadd.f32 %v112, %v551
  %553 = vmatmul.bf16.gmra.mxu0 %v312
  %v554 = vpop.f32.mrf.mxu0
  %v555 = vadd.f32 %v112, %v554
  %v556 = vpop.f32.mrf.mxu0
  %v557 = vadd.f32 %v112, %v556
  %558 = vmatmul.bf16.gmra.mxu0 %v314
  %v559 = vpop.f32.mrf.mxu0
  %v560 = vadd.f32 %v112, %v559
  %v561 = vpop.f32.mrf.mxu0
  %v562 = vadd.f32 %v112, %v561
  %563 = vmatmul.bf16.gmra.mxu0 %v316
  %v564 = vpop.f32.mrf.mxu0
  %v565 = vadd.f32 %v112, %v564
  %v566 = vpop.f32.mrf.mxu0
  %v567 = vadd.f32 %v112, %v566
  %568 = vmatmul.bf16.gmra.mxu0 %v318
  %v569 = vpop.f32.mrf.mxu0
  %v570 = vadd.f32 %v112, %v569
  %v571 = vpop.f32.mrf.mxu0
  %v572 = vadd.f32 %v112, %v571
  %573 = vmatmul.bf16.gmra.mxu0 %v320
  %v574 = vpop.f32.mrf.mxu0
  %v575 = vadd.f32 %v112, %v574
  %v576 = vpop.f32.mrf.mxu0
  %v577 = vadd.f32 %v112, %v576
  %578 = vmatmul.bf16.gmra.mxu0 %v322
  %v579 = vpop.f32.mrf.mxu0
  %v580 = vadd.f32 %v112, %v579
  %v581 = vpop.f32.mrf.mxu0
  %v582 = vadd.f32 %v112, %v581
  %583 = vmatmul.bf16.gmra.mxu0 %v324
  %v584 = vpop.f32.mrf.mxu0
  %v585 = vadd.f32 %v112, %v584
  %v586 = vpop.f32.mrf.mxu0
  %v587 = vadd.f32 %v112, %v586
  %588 = vmatmul.bf16.gmra.mxu0 %v326
  %v589 = vpop.f32.mrf.mxu0
  %v590 = vadd.f32 %v112, %v589
  %v591 = vpop.f32.mrf.mxu0
  %v592 = vadd.f32 %v112, %v591
  %593 = vmatmul.bf16.gmra.mxu0 %v328
  %v594 = vpop.f32.mrf.mxu0
  %v595 = vadd.f32 %v112, %v594
  %v596 = vpop.f32.mrf.mxu0
  %v597 = vadd.f32 %v112, %v596
  %598 = vmatmul.bf16.gmra.mxu0 %v330
  %v599 = vpop.f32.mrf.mxu0
  %v600 = vadd.f32 %v112, %v599
  %v601 = vpop.f32.mrf.mxu0
  %v602 = vadd.f32 %v112, %v601
  %603 = vmatmul.bf16.gmra.mxu0 %v332
  %v604 = vpop.f32.mrf.mxu0
  %v605 = vadd.f32 %v112, %v604
  %v606 = vpop.f32.mrf.mxu0
  %v607 = vadd.f32 %v112, %v606
  %608 = vmatmul.bf16.gmra.mxu0 %v334
  %v609 = vpop.f32.mrf.mxu0
  %v610 = vadd.f32 %v112, %v609
  %v611 = vpop.f32.mrf.mxu0
  %v612 = vadd.f32 %v112, %v611
  %613 = vmatmul.bf16.gmra.mxu0 %v336
  %v614 = vpop.f32.mrf.mxu0
  %v615 = vadd.f32 %v112, %v614
  %v616 = vpop.f32.mrf.mxu0
  %v617 = vadd.f32 %v112, %v616
  %618 = vmatmul.bf16.gmra.mxu0 %v338
  %v619 = vpop.f32.mrf.mxu0
  %v620 = vadd.f32 %v112, %v619
  %v621 = vpop.f32.mrf.mxu0
  %v622 = vadd.f32 %v112, %v621
  %623 = vmatmul.bf16.gmra.mxu0 %v340
  %v624 = vpop.f32.mrf.mxu0
  %v625 = vadd.f32 %v112, %v624
  %v626 = vpop.f32.mrf.mxu0
  %v627 = vadd.f32 %v112, %v626
  %628 = vmatmul.bf16.gmra.mxu0 %v342
  %v629 = vpop.f32.mrf.mxu0
  %v630 = vadd.f32 %v112, %v629
  %v631 = vpop.f32.mrf.mxu0
  %v632 = vadd.f32 %v112, %v631
  %633 = vmatmul.bf16.gmra.mxu0 %v344
  %v634 = vpop.f32.mrf.mxu0
  %v635 = vadd.f32 %v112, %v634
  %v636 = vpop.f32.mrf.mxu0
  %v637 = vadd.f32 %v112, %v636
  %638 = vmatmul.bf16.gmra.mxu0 %v346
  %v639 = vpop.f32.mrf.mxu0
  %v640 = vadd.f32 %v112, %v639
  %v641 = vpop.f32.mrf.mxu0
  %v642 = vadd.f32 %v112, %v641
  %643 = vmatmul.bf16.gmra.mxu0 %v348
  %v644 = vpop.f32.mrf.mxu0
  %v645 = vadd.f32 %v112, %v644
  %v646 = vpop.f32.mrf.mxu0
  %v647 = vadd.f32 %v112, %v646
  %648 = vmatmul.bf16.gmra.mxu0 %v350
  %v649 = vpop.f32.mrf.mxu0
  %v650 = vadd.f32 %v112, %v649
  %v651 = vpop.f32.mrf.mxu0
  %v652 = vadd.f32 %v112, %v651
  %653 = vmatmul.bf16.gmra.mxu0 %v352
  %v654 = vpop.f32.mrf.mxu0
  %v655 = vadd.f32 %v112, %v654
  %v656 = vpop.f32.mrf.mxu0
  %v657 = vadd.f32 %v112, %v656
  %658 = vmatmul.bf16.gmra.mxu0 %v354
  %v659 = vpop.f32.mrf.mxu0
  %v660 = vadd.f32 %v112, %v659
  %v661 = vpop.f32.mrf.mxu0
  %v662 = vadd.f32 %v112, %v661
  %663 = vmatmul.bf16.gmra.mxu0 %v356
  %v664 = vpop.f32.mrf.mxu0
  %v665 = vadd.f32 %v112, %v664
  %v666 = vpop.f32.mrf.mxu0
  %v667 = vadd.f32 %v112, %v666
  %668 = vmatmul.bf16.gmra.mxu0 %v358
  %v669 = vpop.f32.mrf.mxu0
  %v670 = vadd.f32 %v112, %v669
  %v671 = vpop.f32.mrf.mxu0
  %v672 = vadd.f32 %v112, %v671
  %673 = vmatmul.bf16.gmra.mxu0 %v360
  %v674 = vpop.f32.mrf.mxu0
  %v675 = vadd.f32 %v112, %v674
  %v676 = vpop.f32.mrf.mxu0
  %v677 = vadd.f32 %v112, %v676
  %678 = vmatmul.bf16.gmra.mxu0 %v362
  %v679 = vpop.f32.mrf.mxu0
  %v680 = vadd.f32 %v112, %v679
  %v681 = vpop.f32.mrf.mxu0
  %v682 = vadd.f32 %v112, %v681
  %683 = vmatmul.bf16.gmra.mxu0 %v364
  %v684 = vpop.f32.mrf.mxu0
  %v685 = vadd.f32 %v112, %v684
  %v686 = vpop.f32.mrf.mxu0
  %v687 = vadd.f32 %v112, %v686
  %688 = vmatmul.bf16.gmra.mxu0 %v366
  %v689 = vpop.f32.mrf.mxu0
  %v690 = vadd.f32 %v112, %v689
  %v691 = vpop.f32.mrf.mxu0
  %v692 = vadd.f32 %v112, %v691
  %693 = vmatmul.bf16.gmra.mxu0 %v368
  %v694 = vpop.f32.mrf.mxu0
  %v695 = vadd.f32 %v112, %v694
  %v696 = vpop.f32.mrf.mxu0
  %v697 = vadd.f32 %v112, %v696
  %698 = vdwg.mxu0
  %699 = vmatpush.bf16.msra.mxu0 %v513
  %700 = vmatpush.bf16.msra.mxu0 %v512
  %701 = vmatpush.bf16.msra.mxu0 %v511
  %702 = vmatpush.bf16.msra.mxu0 %v510
  %703 = vmatpush.bf16.msra.mxu0 %v509
  %704 = vmatpush.bf16.msra.mxu0 %v508
  %705 = vmatpush.bf16.msra.mxu0 %v507
  %706 = vmatpush.bf16.msra.mxu0 %v506
  %707 = vmatmul.bf16.gmra.mxu0 %v307
  %v708 = vpop.f32.mrf.mxu0
  %v709 = vadd.f32 %v540, %v708
  %v710 = vpop.f32.mrf.mxu0
  %v711 = vadd.f32 %v542, %v710
  %712 = vmatmul.bf16.gmra.mxu0 %v309
  %v713 = vpop.f32.mrf.mxu0
  %v714 = vadd.f32 %v545, %v713
  %v715 = vpop.f32.mrf.mxu0
  %v716 = vadd.f32 %v547, %v715
  %717 = vmatmul.bf16.gmra.mxu0 %v311
  %v718 = vpop.f32.mrf.mxu0
  %v719 = vadd.f32 %v550, %v718
  %v720 = vpop.f32.mrf.mxu0
  %v721 = vadd.f32 %v552, %v720
  %722 = vmatmul.bf16.gmra.mxu0 %v313
  %v723 = vpop.f32.mrf.mxu0
  %v724 = vadd.f32 %v555, %v723
  %v725 = vpop.f32.mrf.mxu0
  %v726 = vadd.f32 %v557, %v725
  %727 = vmatmul.bf16.gmra.mxu0 %v315
  %v728 = vpop.f32.mrf.mxu0
  %v729 = vadd.f32 %v560, %v728
  %v730 = vpop.f32.mrf.mxu0
  %v731 = vadd.f32 %v562, %v730
  %732 = vmatmul.bf16.gmra.mxu0 %v317
  %v733 = vpop.f32.mrf.mxu0
  %v734 = vadd.f32 %v565, %v733
  %v735 = vpop.f32.mrf.mxu0
  %v736 = vadd.f32 %v567, %v735
  %737 = vmatmul.bf16.gmra.mxu0 %v319
  %v738 = vpop.f32.mrf.mxu0
  %v739 = vadd.f32 %v570, %v738
  %v740 = vpop.f32.mrf.mxu0
  %v741 = vadd.f32 %v572, %v740
  %742 = vmatmul.bf16.gmra.mxu0 %v321
  %v743 = vpop.f32.mrf.mxu0
  %v744 = vadd.f32 %v575, %v743
  %v745 = vpop.f32.mrf.mxu0
  %v746 = vadd.f32 %v577, %v745
  %747 = vmatmul.bf16.gmra.mxu0 %v323
  %v748 = vpop.f32.mrf.mxu0
  %v749 = vadd.f32 %v580, %v748
  %v750 = vpop.f32.mrf.mxu0
  %v751 = vadd.f32 %v582, %v750
  %752 = vmatmul.bf16.gmra.mxu0 %v325
  %v753 = vpop.f32.mrf.mxu0
  %v754 = vadd.f32 %v585, %v753
  %v755 = vpop.f32.mrf.mxu0
  %v756 = vadd.f32 %v587, %v755
  %757 = vmatmul.bf16.gmra.mxu0 %v327
  %v758 = vpop.f32.mrf.mxu0
  %v759 = vadd.f32 %v590, %v758
  %v760 = vpop.f32.mrf.mxu0
  %v761 = vadd.f32 %v592, %v760
  %762 = vmatmul.bf16.gmra.mxu0 %v329
  %v763 = vpop.f32.mrf.mxu0
  %v764 = vadd.f32 %v595, %v763
  %v765 = vpop.f32.mrf.mxu0
  %v766 = vadd.f32 %v597, %v765
  %767 = vmatmul.bf16.gmra.mxu0 %v331
  %v768 = vpop.f32.mrf.mxu0
  %v769 = vadd.f32 %v600, %v768
  %v770 = vpop.f32.mrf.mxu0
  %v771 = vadd.f32 %v602, %v770
  %772 = vmatmul.bf16.gmra.mxu0 %v333
  %v773 = vpop.f32.mrf.mxu0
  %v774 = vadd.f32 %v605, %v773
  %v775 = vpop.f32.mrf.mxu0
  %v776 = vadd.f32 %v607, %v775
  %777 = vmatmul.bf16.gmra.mxu0 %v335
  %v778 = vpop.f32.mrf.mxu0
  %v779 = vadd.f32 %v610, %v778
  %v780 = vpop.f32.mrf.mxu0
  %v781 = vadd.f32 %v612, %v780
  %782 = vmatmul.bf16.gmra.mxu0 %v337
  %v783 = vpop.f32.mrf.mxu0
  %v784 = vadd.f32 %v615, %v783
  %v785 = vpop.f32.mrf.mxu0
  %v786 = vadd.f32 %v617, %v785
  %787 = vmatmul.bf16.gmra.mxu0 %v339
  %v788 = vpop.f32.mrf.mxu0
  %v789 = vadd.f32 %v620, %v788
  %v790 = vpop.f32.mrf.mxu0
  %v791 = vadd.f32 %v622, %v790
  %792 = vmatmul.bf16.gmra.mxu0 %v341
  %v793 = vpop.f32.mrf.mxu0
  %v794 = vadd.f32 %v625, %v793
  %v795 = vpop.f32.mrf.mxu0
  %v796 = vadd.f32 %v627, %v795
  %797 = vmatmul.bf16.gmra.mxu0 %v343
  %v798 = vpop.f32.mrf.mxu0
  %v799 = vadd.f32 %v630, %v798
  %v800 = vpop.f32.mrf.mxu0
  %v801 = vadd.f32 %v632, %v800
  %802 = vmatmul.bf16.gmra.mxu0 %v345
  %v803 = vpop.f32.mrf.mxu0
  %v804 = vadd.f32 %v635, %v803
  %v805 = vpop.f32.mrf.mxu0
  %v806 = vadd.f32 %v637, %v805
  %807 = vmatmul.bf16.gmra.mxu0 %v347
  %v808 = vpop.f32.mrf.mxu0
  %v809 = vadd.f32 %v640, %v808
  %v810 = vpop.f32.mrf.mxu0
  %v811 = vadd.f32 %v642, %v810
  %812 = vmatmul.bf16.gmra.mxu0 %v349
  %v813 = vpop.f32.mrf.mxu0
  %v814 = vadd.f32 %v645, %v813
  %v815 = vpop.f32.mrf.mxu0
  %v816 = vadd.f32 %v647, %v815
  %817 = vmatmul.bf16.gmra.mxu0 %v351
  %v818 = vpop.f32.mrf.mxu0
  %v819 = vadd.f32 %v650, %v818
  %v820 = vpop.f32.mrf.mxu0
  %v821 = vadd.f32 %v652, %v820
  %822 = vmatmul.bf16.gmra.mxu0 %v353
  %v823 = vpop.f32.mrf.mxu0
  %v824 = vadd.f32 %v655, %v823
  %v825 = vpop.f32.mrf.mxu0
  %v826 = vadd.f32 %v657, %v825
  %827 = vmatmul.bf16.gmra.mxu0 %v355
  %v828 = vpop.f32.mrf.mxu0
  %v829 = vadd.f32 %v660, %v828
  %v830 = vpop.f32.mrf.mxu0
  %v831 = vadd.f32 %v662, %v830
  %832 = vmatmul.bf16.gmra.mxu0 %v357
  %v833 = vpop.f32.mrf.mxu0
  %v834 = vadd.f32 %v665, %v833
  %v835 = vpop.f32.mrf.mxu0
  %v836 = vadd.f32 %v667, %v835
  %837 = vmatmul.bf16.gmra.mxu0 %v359
  %v838 = vpop.f32.mrf.mxu0
  %v839 = vadd.f32 %v670, %v838
  %v840 = vpop.f32.mrf.mxu0
  %v841 = vadd.f32 %v672, %v840
  %842 = vmatmul.bf16.gmra.mxu0 %v361
  %v843 = vpop.f32.mrf.mxu0
  %v844 = vadd.f32 %v675, %v843
  %v845 = vpop.f32.mrf.mxu0
  %v846 = vadd.f32 %v677, %v845
  %847 = vmatmul.bf16.gmra.mxu0 %v363
  %v848 = vpop.f32.mrf.mxu0
  %v849 = vadd.f32 %v680, %v848
  %v850 = vpop.f32.mrf.mxu0
  %v851 = vadd.f32 %v682, %v850
  %852 = vmatmul.bf16.gmra.mxu0 %v365
  %v853 = vpop.f32.mrf.mxu0
  %v854 = vadd.f32 %v685, %v853
  %v855 = vpop.f32.mrf.mxu0
  %v856 = vadd.f32 %v687, %v855
  %857 = vmatmul.bf16.gmra.mxu0 %v367
  %v858 = vpop.f32.mrf.mxu0
  %v859 = vadd.f32 %v690, %v858
  %v860 = vpop.f32.mrf.mxu0
  %v861 = vadd.f32 %v692, %v860
  %862 = vmatmul.bf16.gmra.mxu0 %v369
  %v863 = vpop.f32.mrf.mxu0
  %v864 = vadd.f32 %v695, %v863
  %v865 = vpop.f32.mrf.mxu0
  %v866 = vadd.f32 %v697, %v865
  %867 = vdwg.mxu0
  %v868 = vmax.f32 %v709, 0.0
  %v869 = vmax.f32 %v711, 0.0
  %v870 = vmax.f32 %v714, 0.0
  %v871 = vmax.f32 %v716, 0.0
  %v872 = vmax.f32 %v719, 0.0
  %v873 = vmax.f32 %v721, 0.0
  %v874 = vmax.f32 %v724, 0.0
  %v875 = vmax.f32 %v726, 0.0
  %v876 = vmax.f32 %v729, 0.0
  %v877 = vmax.f32 %v731, 0.0
  %v878 = vmax.f32 %v734, 0.0
  %v879 = vmax.f32 %v736, 0.0
  %v880 = vmax.f32 %v739, 0.0
  %v881 = vmax.f32 %v741, 0.0
  %v882 = vmax.f32 %v744, 0.0
  %v883 = vmax.f32 %v746, 0.0
  %v884 = vmax.f32 %v749, 0.0
  %v885 = vmax.f32 %v751, 0.0
  %v886 = vmax.f32 %v754, 0.0
  %v887 = vmax.f32 %v756, 0.0
  %v888 = vmax.f32 %v759, 0.0
  %v889 = vmax.f32 %v761, 0.0
  %v890 = vmax.f32 %v764, 0.0
  %v891 = vmax.f32 %v766, 0.0
  %v892 = vmax.f32 %v769, 0.0
  %v893 = vmax.f32 %v771, 0.0
  %v894 = vmax.f32 %v774, 0.0
  %v895 = vmax.f32 %v776, 0.0
  %v896 = vmax.f32 %v779, 0.0
  %v897 = vmax.f32 %v781, 0.0
  %v898 = vmax.f32 %v784, 0.0
  %v899 = vmax.f32 %v786, 0.0
  %v900 = vmax.f32 %v789, 0.0
  %v901 = vmax.f32 %v791, 0.0
  %v902 = vmax.f32 %v794, 0.0
  %v903 = vmax.f32 %v796, 0.0
  %v904 = vmax.f32 %v799, 0.0
  %v905 = vmax.f32 %v801, 0.0
  %v906 = vmax.f32 %v804, 0.0
  %v907 = vmax.f32 %v806, 0.0
  %v908 = vmax.f32 %v809, 0.0
  %v909 = vmax.f32 %v811, 0.0
  %v910 = vmax.f32 %v814, 0.0
  %v911 = vmax.f32 %v816, 0.0
  %v912 = vmax.f32 %v819, 0.0
  %v913 = vmax.f32 %v821, 0.0
  %v914 = vmax.f32 %v824, 0.0
  %v915 = vmax.f32 %v826, 0.0
  %v916 = vmax.f32 %v829, 0.0
  %v917 = vmax.f32 %v831, 0.0
  %v918 = vmax.f32 %v834, 0.0
  %v919 = vmax.f32 %v836, 0.0
  %v920 = vmax.f32 %v839, 0.0
  %v921 = vmax.f32 %v841, 0.0
  %v922 = vmax.f32 %v844, 0.0
  %v923 = vmax.f32 %v846, 0.0
  %v924 = vmax.f32 %v849, 0.0
  %v925 = vmax.f32 %v851, 0.0
  %v926 = vmax.f32 %v854, 0.0
  %v927 = vmax.f32 %v856, 0.0
  %v928 = vmax.f32 %v859, 0.0
  %v929 = vmax.f32 %v861, 0.0
  %v930 = vmax.f32 %v864, 0.0
  %v931 = vmax.f32 %v866, 0.0
  %v932 = vpack.c.bf16 %v868, %v868
  %v933 = vpack.c.bf16 %v869, %v869
  %v934 = vpack.c.bf16 %v870, %v870
  %v935 = vpack.c.bf16 %v871, %v871
  %v936 = vpack.c.bf16 %v872, %v872
  %v937 = vpack.c.bf16 %v873, %v873
  %v938 = vpack.c.bf16 %v874, %v874
  %v939 = vpack.c.bf16 %v875, %v875
  %v940 = vpack.c.bf16 %v876, %v876
  %v941 = vpack.c.bf16 %v877, %v877
  %v942 = vpack.c.bf16 %v878, %v878
  %v943 = vpack.c.bf16 %v879, %v879
  %v944 = vpack.c.bf16 %v880, %v880
  %v945 = vpack.c.bf16 %v881, %v881
  %v946 = vpack.c.bf16 %v882, %v882
  %v947 = vpack.c.bf16 %v883, %v883
  %v948 = vpack.c.bf16 %v884, %v884
  %v949 = vpack.c.bf16 %v885, %v885
  %v950 = vpack.c.bf16 %v886, %v886
  %v951 = vpack.c.bf16 %v887, %v887
  %v952 = vpack.c.bf16 %v888, %v888
  %v953 = vpack.c.bf16 %v889, %v889
  %v954 = vpack.c.bf16 %v890, %v890
  %v955 = vpack.c.bf16 %v891, %v891
  %v956 = vpack.c.bf16 %v892, %v892
  %v957 = vpack.c.bf16 %v893, %v893
  %v958 = vpack.c.bf16 %v894, %v894
  %v959 = vpack.c.bf16 %v895, %v895
  %v960 = vpack.c.bf16 %v896, %v896
  %v961 = vpack.c.bf16 %v897, %v897
  %v962 = vpack.c.bf16 %v898, %v898
  %v963 = vpack.c.bf16 %v899, %v899
  %v964 = vpack.c.bf16 %v900, %v900
  %v965 = vpack.c.bf16 %v901, %v901
  %v966 = vpack.c.bf16 %v902, %v902
  %v967 = vpack.c.bf16 %v903, %v903
  %v968 = vpack.c.bf16 %v904, %v904
  %v969 = vpack.c.bf16 %v905, %v905
  %v970 = vpack.c.bf16 %v906, %v906
  %v971 = vpack.c.bf16 %v907, %v907
  %v972 = vpack.c.bf16 %v908, %v908
  %v973 = vpack.c.bf16 %v909, %v909
  %v974 = vpack.c.bf16 %v910, %v910
  %v975 = vpack.c.bf16 %v911, %v911
  %v976 = vpack.c.bf16 %v912, %v912
  %v977 = vpack.c.bf16 %v913, %v913
  %v978 = vpack.c.bf16 %v914, %v914
  %v979 = vpack.c.bf16 %v915, %v915
  %v980 = vpack.c.bf16 %v916, %v916
  %v981 = vpack.c.bf16 %v917, %v917
  %v982 = vpack.c.bf16 %v918, %v918
  %v983 = vpack.c.bf16 %v919, %v919
  %v984 = vpack.c.bf16 %v920, %v920
  %v985 = vpack.c.bf16 %v921, %v921
  %v986 = vpack.c.bf16 %v922, %v922
  %v987 = vpack.c.bf16 %v923, %v923
  %v988 = vpack.c.bf16 %v924, %v924
  %v989 = vpack.c.bf16 %v925, %v925
  %v990 = vpack.c.bf16 %v926, %v926
  %v991 = vpack.c.bf16 %v927, %v927
  %v992 = vpack.c.bf16 %v928, %v928
  %v993 = vpack.c.bf16 %v929, %v929
  %v994 = vpack.c.bf16 %v930, %v930
  %v995 = vpack.c.bf16 %v931, %v931
  %996 = vst [vmem:[%s3] sm:$0xf] %v932
  %997 = vst [vmem:[%s3 + $0x4] sm:$0xf] %v933
  %998 = vst [vmem:[%s3 + $0x8] sm:$0xf] %v934
  %999 = vst [vmem:[%s3 + $0xc] sm:$0xf] %v935
  %1000 = vst [vmem:[%s3 + $0x10] sm:$0xf] %v936
  %1001 = vst [vmem:[%s3 + $0x14] sm:$0xf] %v937
  %1002 = vst [vmem:[%s3 + $0x18] sm:$0xf] %v938
  %1003 = vst [vmem:[%s3 + $0x1c] sm:$0xf] %v939
  %1004 = vst [vmem:[%s3 + $0x20] sm:$0xf] %v940
  %1005 = vst [vmem:[%s3 + $0x24] sm:$0xf] %v941
  %1006 = vst [vmem:[%s3 + $0x28] sm:$0xf] %v942
  %1007 = vst [vmem:[%s3 + $0x2c] sm:$0xf] %v943
  %1008 = vst [vmem:[%s3 + $0x30] sm:$0xf] %v944
  %1009 = vst [vmem:[%s3 + $0x34] sm:$0xf] %v945
  %1010 = vst [vmem:[%s3 + $0x38] sm:$0xf] %v946
  %1011 = vst [vmem:[%s3 + $0x3c] sm:$0xf] %v947
  %1012 = vst [vmem:[%s3 + $0x40] sm:$0xf] %v948
  %1013 = vst [vmem:[%s3 + $0x44] sm:$0xf] %v949
  %1014 = vst [vmem:[%s3 + $0x48] sm:$0xf] %v950
  %1015 = vst [vmem:[%s3 + $0x4c] sm:$0xf] %v951
  %1016 = vst [vmem:[%s3 + $0x50] sm:$0xf] %v952
  %1017 = vst [vmem:[%s3 + $0x54] sm:$0xf] %v953
  %1018 = vst [vmem:[%s3 + $0x58] sm:$0xf] %v954
  %1019 = vst [vmem:[%s3 + $0x5c] sm:$0xf] %v955
  %1020 = vst [vmem:[%s3 + $0x60] sm:$0xf] %v956
  %1021 = vst [vmem:[%s3 + $0x64] sm:$0xf] %v957
  %1022 = vst [vmem:[%s3 + $0x68] sm:$0xf] %v958
  %1023 = vst [vmem:[%s3 + $0x6c] sm:$0xf] %v959
  %1024 = vst [vmem:[%s3 + $0x70] sm:$0xf] %v960
  %1025 = vst [vmem:[%s3 + $0x74] sm:$0xf] %v961
  %1026 = vst [vmem:[%s3 + $0x78] sm:$0xf] %v962
  %1027 = vst [vmem:[%s3 + $0x7c] sm:$0xf] %v963
  %1028 = vst [vmem:[%s3 + $0x80] sm:$0xf] %v964
  %1029 = vst [vmem:[%s3 + $0x84] sm:$0xf] %v965
  %1030 = vst [vmem:[%s3 + $0x88] sm:$0xf] %v966
  %1031 = vst [vmem:[%s3 + $0x8c] sm:$0xf] %v967
  %1032 = vst [vmem:[%s3 + $0x90] sm:$0xf] %v968
  %1033 = vst [vmem:[%s3 + $0x94] sm:$0xf] %v969
  %1034 = vst [vmem:[%s3 + $0x98] sm:$0xf] %v970
  %1035 = vst [vmem:[%s3 + $0x9c] sm:$0xf] %v971
  %1036 = vst [vmem:[%s3 + $0xa0] sm:$0xf] %v972
  %1037 = vst [vmem:[%s3 + $0xa4] sm:$0xf] %v973
  %1038 = vst [vmem:[%s3 + $0xa8] sm:$0xf] %v974
  %1039 = vst [vmem:[%s3 + $0xac] sm:$0xf] %v975
  %1040 = vst [vmem:[%s3 + $0xb0] sm:$0xf] %v976
  %1041 = vst [vmem:[%s3 + $0xb4] sm:$0xf] %v977
  %1042 = vst [vmem:[%s3 + $0xb8] sm:$0xf] %v978
  %1043 = vst [vmem:[%s3 + $0xbc] sm:$0xf] %v979
  %1044 = vst [vmem:[%s3 + $0xc0] sm:$0xf] %v980
  %1045 = vst [vmem:[%s3 + $0xc4] sm:$0xf] %v981
  %1046 = vst [vmem:[%s3 + $0xc8] sm:$0xf] %v982
  %1047 = vst [vmem:[%s3 + $0xcc] sm:$0xf] %v983
  %1048 = vst [vmem:[%s3 + $0xd0] sm:$0xf] %v984
  %1049 = vst [vmem:[%s3 + $0xd4] sm:$0xf] %v985
  %1050 = vst [vmem:[%s3 + $0xd8] sm:$0xf] %v986
  %1051 = vst [vmem:[%s3 + $0xdc] sm:$0xf] %v987
  %1052 = vst [vmem:[%s3 + $0xe0] sm:$0xf] %v988
  %1053 = vst [vmem:[%s3 + $0xe4] sm:$0xf] %v989
  %1054 = vst [vmem:[%s3 + $0xe8] sm:$0xf] %v990
  %1055 = vst [vmem:[%s3 + $0xec] sm:$0xf] %v991
  %1056 = vst [vmem:[%s3 + $0xf0] sm:$0xf] %v992
  %1057 = vst [vmem:[%s3 + $0xf4] sm:$0xf] %v993
  %1058 = vst [vmem:[%s3 + $0xf8] sm:$0xf] %v994
  %1059 = vst [vmem:[%s3 + $0xfc] sm:$0xf] %v995
  // Predicated region
  $region14: #{style_encoder_forward.3} parent=0 // pred_check
    _
  $region15: #{style_encoder_forward.3} parent=0 // pred_check_branch
    %1061 = sbr.rel (0) target = $region17
  $region16: #{style_encoder_forward.3} parent=0 // pred_region
    _
  $region17: #{style_encoder_forward.3} parent=0 // pred_fallthru
    _
  // Predicated region
  $region18: #{style_encoder_forward.3} parent=0 // pred_check
    _
  $region19: #{style_encoder_forward.3} parent=0 // pred_check_branch
    %1063 = sbr.rel (0) target = $region21
  $region20: #{style_encoder_forward.3} parent=0 // pred_region
    _
  $region21: #{style_encoder_forward.3} parent=0 // pred_fallthru
    _

// kernel: style_encoder_forward.4
$region0: #{style_encoder_forward.4}
  #allocation0 [shape = 'u32[]', space=smem, size = 0x4, offset = 0x4, fixed_abs, tag = 'smem constant byte address 0x4 - core index']
  #allocation1 [shape = 'u32[72,128]{1,0:T(1,128)}', space=vmem, size = 0x9000, scoped, tag = 'internal scratch']
  %s0 = inlined_call_operand.vmem [shape: bf16[128,128], index: 0, kind: input, shape index: {}]
  %s1 = inlined_call_operand.vmem [shape: bf16[128,128], index: 1, kind: input, shape index: {}]
  %s2 = inlined_call_operand.vmem [shape: f32[1,128], index: 2, kind: input, shape index: {}]
  %s3 = inlined_call_operand.vmem [shape: bf16[128,128], index: 3, kind: output, shape index: {}]
  %s4 = sld [smem:[#allocation0]]
  $region22: #{style_encoder_forward.4} parent=0
    _
  %s6 = ssub.s32 1, %s4
  %s7 = scalar_select 0, %s6, %s4
  // Predicated region
  $region2: #{style_encoder_forward.4} parent=0 // pred_check
    _
  $region3: #{style_encoder_forward.4} parent=0 // pred_check_branch
    %9 = sbr.rel (0) target = $region5
  $region4: #{style_encoder_forward.4} parent=0 // pred_region
    _
  $region5: #{style_encoder_forward.4} parent=0 // pred_fallthru
    _
  // Predicated region
  $region6: #{style_encoder_forward.4} parent=0 // pred_check
    _
  $region7: #{style_encoder_forward.4} parent=0 // pred_check_branch
    %11 = sbr.rel (0) target = $region9
  $region8: #{style_encoder_forward.4} parent=0 // pred_region
    _
  $region9: #{style_encoder_forward.4} parent=0 // pred_fallthru
    _
  // Predicated region
  $region10: #{style_encoder_forward.4} parent=0 // pred_check
    _
  $region11: #{style_encoder_forward.4} parent=0 // pred_check_branch
    %13 = sbr.rel (0) target = $region13
  $region12: #{style_encoder_forward.4} parent=0 // pred_region
    _
  $region13: #{style_encoder_forward.4} parent=0 // pred_fallthru
    _
  %v14 = vld [vmem:[%s0] sm:$0xf]
  %v15 = vld [vmem:[%s0 + $0x4] sm:$0xf]
  %v16 = vld [vmem:[%s0 + $0x8] sm:$0xf]
  %v17 = vld [vmem:[%s0 + $0xc] sm:$0xf]
  %v18 = vld [vmem:[%s0 + $0x10] sm:$0xf]
  %v19 = vld [vmem:[%s0 + $0x14] sm:$0xf]
  %v20 = vld [vmem:[%s0 + $0x18] sm:$0xf]
  %v21 = vld [vmem:[%s0 + $0x1c] sm:$0xf]
  %v22 = vld [vmem:[%s0 + $0x20] sm:$0xf]
  %v23 = vld [vmem:[%s0 + $0x24] sm:$0xf]
  %v24 = vld [vmem:[%s0 + $0x28] sm:$0xf]
  %v25 = vld [vmem:[%s0 + $0x2c] sm:$0xf]
  %v26 = vld [vmem:[%s0 + $0x30] sm:$0xf]
  %v27 = vld [vmem:[%s0 + $0x34] sm:$0xf]
  %v28 = vld [vmem:[%s0 + $0x38] sm:$0xf]
  %v29 = vld [vmem:[%s0 + $0x3c] sm:$0xf]
  %v30 = vld [vmem:[%s1] sm:$0xf]
  %v31 = vld [vmem:[%s1 + $0x4] sm:$0xf]
  %v32 = vld [vmem:[%s1 + $0x8] sm:$0xf]
  %v33 = vld [vmem:[%s1 + $0xc] sm:$0xf]
  %v34 = vld [vmem:[%s1 + $0x10] sm:$0xf]
  %v35 = vld [vmem:[%s1 + $0x14] sm:$0xf]
  %v36 = vld [vmem:[%s1 + $0x18] sm:$0xf]
  %v37 = vld [vmem:[%s1 + $0x1c] sm:$0xf]
  %v38 = vld [vmem:[%s1 + $0x20] sm:$0xf]
  %v39 = vld [vmem:[%s1 + $0x24] sm:$0xf]
  %v40 = vld [vmem:[%s1 + $0x28] sm:$0xf]
  %v41 = vld [vmem:[%s1 + $0x2c] sm:$0xf]
  %v42 = vld [vmem:[%s1 + $0x30] sm:$0xf]
  %v43 = vld [vmem:[%s1 + $0x34] sm:$0xf]
  %v44 = vld [vmem:[%s1 + $0x38] sm:$0xf]
  %v45 = vld [vmem:[%s1 + $0x3c] sm:$0xf]
  %v46 = vld [vmem:[%s2] sm:$0x1]
  %v48 = vperm.slane %v46, 0
  %v66 = vunpack.c.l.b16 %v14
  %v67 = vunpack.c.l.b16 %v15
  %v68 = vunpack.c.l.b16 %v16
  %v69 = vunpack.c.l.b16 %v17
  %v70 = vunpack.c.l.b16 %v18
  %v71 = vunpack.c.l.b16 %v19
  %v72 = vunpack.c.l.b16 %v20
  %v73 = vunpack.c.l.b16 %v21
  %v74 = vunpack.c.l.b16 %v22
  %v75 = vunpack.c.l.b16 %v23
  %v76 = vunpack.c.l.b16 %v24
  %v77 = vunpack.c.l.b16 %v25
  %v78 = vunpack.c.l.b16 %v26
  %v79 = vunpack.c.l.b16 %v27
  %v80 = vunpack.c.l.b16 %v28
  %v81 = vunpack.c.l.b16 %v29
  %v82 = vpack.c.b16 %v67, %v66
  %v83 = vpack.c.b16 %v69, %v68
  %v84 = vpack.c.b16 %v71, %v70
  %v85 = vpack.c.b16 %v73, %v72
  %v86 = vpack.c.b16 %v75, %v74
  %v87 = vpack.c.b16 %v77, %v76
  %v88 = vpack.c.b16 %v79, %v78
  %v89 = vpack.c.b16 %v81, %v80
  %v114 = vunpack.c.l.b16 %v30
  %v115 = vunpack.c.l.b16 %v31
  %v116 = vunpack.c.l.b16 %v32
  %v117 = vunpack.c.l.b16 %v33
  %v118 = vunpack.c.l.b16 %v34
  %v119 = vunpack.c.l.b16 %v35
  %v120 = vunpack.c.l.b16 %v36
  %v121 = vunpack.c.l.b16 %v37
  %v122 = vunpack.c.l.b16 %v38
  %v123 = vunpack.c.l.b16 %v39
  %v124 = vunpack.c.l.b16 %v40
  %v125 = vunpack.c.l.b16 %v41
  %v126 = vunpack.c.l.b16 %v42
  %v127 = vunpack.c.l.b16 %v43
  %v128 = vunpack.c.l.b16 %v44
  %v129 = vunpack.c.l.b16 %v45
  %v130 = vpack.c.b16 %v115, %v114
  %v131 = vpack.c.b16 %v117, %v116
  %v132 = vpack.c.b16 %v119, %v118
  %v133 = vpack.c.b16 %v121, %v120
  %v134 = vpack.c.b16 %v123, %v122
  %v135 = vpack.c.b16 %v125, %v124
  %v136 = vpack.c.b16 %v127, %v126
  %v137 = vpack.c.b16 %v129, %v128
  %146 = vmatpush.bf16.msra.mxu0 %v137
  %147 = vmatpush.bf16.msra.mxu0 %v136
  %148 = vmatpush.bf16.msra.mxu0 %v135
  %149 = vmatpush.bf16.msra.mxu0 %v134
  %150 = vmatpush.bf16.msra.mxu0 %v133
  %151 = vmatpush.bf16.msra.mxu0 %v132
  %152 = vmatpush.bf16.msra.mxu0 %v131
  %153 = vmatpush.bf16.msra.mxu0 %v130
  %154 = vmatmul.bf16.gmra.mxu0 %v82
  %v155 = vpop.f32.mrf.mxu0
  %v156 = vadd.f32 %v48, %v155
  %v157 = vpop.f32.mrf.mxu0
  %v158 = vadd.f32 %v48, %v157
  %159 = vmatmul.bf16.gmra.mxu0 %v83
  %v160 = vpop.f32.mrf.mxu0
  %v161 = vadd.f32 %v48, %v160
  %v162 = vpop.f32.mrf.mxu0
  %v163 = vadd.f32 %v48, %v162
  %164 = vmatmul.bf16.gmra.mxu0 %v84
  %v165 = vpop.f32.mrf.mxu0
  %v166 = vadd.f32 %v48, %v165
  %v167 = vpop.f32.mrf.mxu0
  %v168 = vadd.f32 %v48, %v167
  %169 = vmatmul.bf16.gmra.mxu0 %v85
  %v170 = vpop.f32.mrf.mxu0
  %v171 = vadd.f32 %v48, %v170
  %v172 = vpop.f32.mrf.mxu0
  %v173 = vadd.f32 %v48, %v172
  %174 = vmatmul.bf16.gmra.mxu0 %v86
  %v175 = vpop.f32.mrf.mxu0
  %v176 = vadd.f32 %v48, %v175
  %v177 = vpop.f32.mrf.mxu0
  %v178 = vadd.f32 %v48, %v177
  %179 = vmatmul.bf16.gmra.mxu0 %v87
  %v180 = vpop.f32.mrf.mxu0
  %v181 = vadd.f32 %v48, %v180
  %v182 = vpop.f32.mrf.mxu0
  %v183 = vadd.f32 %v48, %v182
  %184 = vmatmul.bf16.gmra.mxu0 %v88
  %v185 = vpop.f32.mrf.mxu0
  %v186 = vadd.f32 %v48, %v185
  %v187 = vpop.f32.mrf.mxu0
  %v188 = vadd.f32 %v48, %v187
  %189 = vmatmul.bf16.gmra.mxu0 %v89
  %v190 = vpop.f32.mrf.mxu0
  %v191 = vadd.f32 %v48, %v190
  %v192 = vpop.f32.mrf.mxu0
  %v193 = vadd.f32 %v48, %v192
  %194 = vdwg.mxu0
  %v195 = vmax.f32 %v156, 0.0
  %v196 = vmax.f32 %v158, 0.0
  %v197 = vmax.f32 %v161, 0.0
  %v198 = vmax.f32 %v163, 0.0
  %v199 = vmax.f32 %v166, 0.0
  %v200 = vmax.f32 %v168, 0.0
  %v201 = vmax.f32 %v171, 0.0
  %v202 = vmax.f32 %v173, 0.0
  %v203 = vmax.f32 %v176, 0.0
  %v204 = vmax.f32 %v178, 0.0
  %v205 = vmax.f32 %v181, 0.0
  %v206 = vmax.f32 %v183, 0.0
  %v207 = vmax.f32 %v186, 0.0
  %v208 = vmax.f32 %v188, 0.0
  %v209 = vmax.f32 %v191, 0.0
  %v210 = vmax.f32 %v193, 0.0
  %v211 = vpack.c.bf16 %v195, %v195
  %v212 = vpack.c.bf16 %v196, %v196
  %v213 = vpack.c.bf16 %v197, %v197
  %v214 = vpack.c.bf16 %v198, %v198
  %v215 = vpack.c.bf16 %v199, %v199
  %v216 = vpack.c.bf16 %v200, %v200
  %v217 = vpack.c.bf16 %v201, %v201
  %v218 = vpack.c.bf16 %v202, %v202
  %v219 = vpack.c.bf16 %v203, %v203
  %v220 = vpack.c.bf16 %v204, %v204
  %v221 = vpack.c.bf16 %v205, %v205
  %v222 = vpack.c.bf16 %v206, %v206
  %v223 = vpack.c.bf16 %v207, %v207
  %v224 = vpack.c.bf16 %v208, %v208
  %v225 = vpack.c.bf16 %v209, %v209
  %v226 = vpack.c.bf16 %v210, %v210
  %227 = vst [vmem:[%s3] sm:$0xf] %v211
  %228 = vst [vmem:[%s3 + $0x4] sm:$0xf] %v212
  %229 = vst [vmem:[%s3 + $0x8] sm:$0xf] %v213
  %230 = vst [vmem:[%s3 + $0xc] sm:$0xf] %v214
  %231 = vst [vmem:[%s3 + $0x10] sm:$0xf] %v215
  %232 = vst [vmem:[%s3 + $0x14] sm:$0xf] %v216
  %233 = vst [vmem:[%s3 + $0x18] sm:$0xf] %v217
  %234 = vst [vmem:[%s3 + $0x1c] sm:$0xf] %v218
  %235 = vst [vmem:[%s3 + $0x20] sm:$0xf] %v219
  %236 = vst [vmem:[%s3 + $0x24] sm:$0xf] %v220
  %237 = vst [vmem:[%s3 + $0x28] sm:$0xf] %v221
  %238 = vst [vmem:[%s3 + $0x2c] sm:$0xf] %v222
  %239 = vst [vmem:[%s3 + $0x30] sm:$0xf] %v223
  %240 = vst [vmem:[%s3 + $0x34] sm:$0xf] %v224
  %241 = vst [vmem:[%s3 + $0x38] sm:$0xf] %v225
  %242 = vst [vmem:[%s3 + $0x3c] sm:$0xf] %v226
  // Predicated region
  $region14: #{style_encoder_forward.4} parent=0 // pred_check
    _
  $region15: #{style_encoder_forward.4} parent=0 // pred_check_branch
    %244 = sbr.rel (0) target = $region17
  $region16: #{style_encoder_forward.4} parent=0 // pred_region
    _
  $region17: #{style_encoder_forward.4} parent=0 // pred_fallthru
    _
  // Predicated region
  $region18: #{style_encoder_forward.4} parent=0 // pred_check
    _
  $region19: #{style_encoder_forward.4} parent=0 // pred_check_branch
    %246 = sbr.rel (0) target = $region21
  $region20: #{style_encoder_forward.4} parent=0 // pred_region
    _
  $region21: #{style_encoder_forward.4} parent=0 // pred_fallthru
    _

// kernel: style_encoder_forward.5
$region0: #{style_encoder_forward.5}
  #allocation0 [shape = 'u32[]', space=smem, size = 0x4, offset = 0x4, fixed_abs, tag = 'smem constant byte address 0x4 - core index']
  #allocation1 [shape = 'u32[72,128]{1,0:T(1,128)}', space=vmem, size = 0x9000, scoped, tag = 'internal scratch']
  #allocation2 [shape = 'f32[2,128]{1,0:T(2,128)}', space=vmem, size = 0x400, scoped, tag = 'scratch operand']
  %s0 = inlined_call_operand.vmem [shape: bf16[2,16,256], index: 0, kind: input, shape index: {}]
  %s1 = inlined_call_operand.vmem [shape: bf16[256,128], index: 1, kind: input, shape index: {}]
  %s2 = inlined_call_operand.vmem [shape: f32[1,128], index: 2, kind: input, shape index: {}]
  %s3 = inlined_call_operand.vmem [shape: f32[128,8], index: 3, kind: input, shape index: {}]
  %s4 = inlined_call_operand.vmem [shape: f32[1,8], index: 4, kind: input, shape index: {}]
  %s5 = inlined_call_operand.hbm [shape: f32[2,8], index: 5, kind: output, shape index: {}]
  %s6 = sld [smem:[#allocation0]]
  $region38: #{style_encoder_forward.5} parent=0
    _
  %s8 = ssub.s32 1, %s6
  %s9 = scalar_select 0, %s8, %s6
  $region1: #{style_encoder_forward.5} parent=0
    #allocation3 [shape = 'u8[1024]{0}', space=vmem, size = 0x400, scoped, tag = 'output window, operand 0, single buffered']
    #allocation4 [shape = 's32[1]{0}', space=sflag, size = 0x4, scoped, tag = 'scoped memory for style_encoder_forward.5']
    %10 = vsyncpa [#allocation4], 0
    // Predicated region
    $region2: #{style_encoder_forward.5} parent=1 // pred_check
      _
    $region3: #{style_encoder_forward.5} parent=1 // pred_check_branch
      %12 = sbr.rel (0) target = $region5
    $region4: #{style_encoder_forward.5} parent=1 // pred_region
      _
    $region5: #{style_encoder_forward.5} parent=1 // pred_fallthru
      _
    // Predicated region
    $region6: #{style_encoder_forward.5} parent=1 // pred_check
      _
    $region7: #{style_encoder_forward.5} parent=1 // pred_check_branch
      %14 = sbr.rel (0) target = $region9
    $region8: #{style_encoder_forward.5} parent=1 // pred_region
      _
    $region9: #{style_encoder_forward.5} parent=1 // pred_fallthru
      _
    // Predicated region
    $region10: #{style_encoder_forward.5} parent=1 // pred_check
      _
    $region11: #{style_encoder_forward.5} parent=1 // pred_check_branch
      %16 = sbr.rel (0) target = $region13
    $region12: #{style_encoder_forward.5} parent=1 // pred_region
      _
    $region13: #{style_encoder_forward.5} parent=1 // pred_fallthru
      _
    // Predicated region
    $region14: #{style_encoder_forward.5} parent=1 // pred_check
      _
    $region15: #{style_encoder_forward.5} parent=1 // pred_check_branch
      %18 = sbr.rel (0) target = $region17
    $region16: #{style_encoder_forward.5} parent=1 // pred_region
      _
    $region17: #{style_encoder_forward.5} parent=1 // pred_fallthru
      _
    // Predicated region
    $region18: #{style_encoder_forward.5} parent=1 // pred_check
      _
    $region19: #{style_encoder_forward.5} parent=1 // pred_check_branch
      %20 = sbr.rel (0) target = $region21
    $region20: #{style_encoder_forward.5} parent=1 // pred_region
      _
    $region21: #{style_encoder_forward.5} parent=1 // pred_fallthru
      _
    %p21 = scmp.eq.s32.totalorder 0, 0
    // Predicated region
    $region22: #{style_encoder_forward.5} parent=1 // pred_check
      %p22 = pneg %p21
    $region23: #{style_encoder_forward.5} parent=1 // pred_check_branch
      %24 = sbr.rel (%p22) target = $region25
    $region24: #{style_encoder_forward.5} parent=1 // pred_region
      %25 = vst [vmem:[#allocation2] sm:$0x3] 0.0
    $region25: #{style_encoder_forward.5} parent=1 // pred_fallthru
      _
    %v26 = vld [vmem:[%s0] sm:$0xff]
    %v27 = vld [vmem:[%s0 + $0x8] sm:$0xff]
    %v28 = vld [vmem:[%s0 + $0x10] sm:$0xff]
    %v29 = vld [vmem:[%s0 + $0x18] sm:$0xff]
    %v30 = vld [vmem:[%s1] sm:$0xf]
    %v31 = vld [vmem:[%s1 + $0x4] sm:$0xf]
    %v32 = vld [vmem:[%s1 + $0x8] sm:$0xf]
    %v33 = vld [vmem:[%s1 + $0xc] sm:$0xf]
    %v34 = vld [vmem:[%s1 + $0x10] sm:$0xf]
    %v35 = vld [vmem:[%s1 + $0x14] sm:$0xf]
    %v36 = vld [vmem:[%s1 + $0x18] sm:$0xf]
    %v37 = vld [vmem:[%s1 + $0x1c] sm:$0xf]
    %v38 = vld [vmem:[%s1 + $0x20] sm:$0xf]
    %v39 = vld [vmem:[%s1 + $0x24] sm:$0xf]
    %v40 = vld [vmem:[%s1 + $0x28] sm:$0xf]
    %v41 = vld [vmem:[%s1 + $0x2c] sm:$0xf]
    %v42 = vld [vmem:[%s1 + $0x30] sm:$0xf]
    %v43 = vld [vmem:[%s1 + $0x34] sm:$0xf]
    %v44 = vld [vmem:[%s1 + $0x38] sm:$0xf]
    %v45 = vld [vmem:[%s1 + $0x3c] sm:$0xf]
    %v46 = vld [vmem:[%s1 + $0x40] sm:$0xf]
    %v47 = vld [vmem:[%s1 + $0x44] sm:$0xf]
    %v48 = vld [vmem:[%s1 + $0x48] sm:$0xf]
    %v49 = vld [vmem:[%s1 + $0x4c] sm:$0xf]
    %v50 = vld [vmem:[%s1 + $0x50] sm:$0xf]
    %v51 = vld [vmem:[%s1 + $0x54] sm:$0xf]
    %v52 = vld [vmem:[%s1 + $0x58] sm:$0xf]
    %v53 = vld [vmem:[%s1 + $0x5c] sm:$0xf]
    %v54 = vld [vmem:[%s1 + $0x60] sm:$0xf]
    %v55 = vld [vmem:[%s1 + $0x64] sm:$0xf]
    %v56 = vld [vmem:[%s1 + $0x68] sm:$0xf]
    %v57 = vld [vmem:[%s1 + $0x6c] sm:$0xf]
    %v58 = vld [vmem:[%s1 + $0x70] sm:$0xf]
    %v59 = vld [vmem:[%s1 + $0x74] sm:$0xf]
    %v60 = vld [vmem:[%s1 + $0x78] sm:$0xf]
    %v61 = vld [vmem:[%s1 + $0x7c] sm:$0xf]
    %v62 = vld [vmem:[%s2] sm:$0x1]
    %v64 = vperm.slane %v62, 0
    %v70 = vunpack.c.l.b16 %v26
    %v71 = vunpack.c.h.b16 %v26
    %v72 = vunpack.c.l.b16 %v27
    %v73 = vunpack.c.h.b16 %v27
    %v74 = vunpack.c.l.b16 %v28
    %v75 = vunpack.c.h.b16 %v28
    %v76 = vunpack.c.l.b16 %v29
    %v77 = vunpack.c.h.b16 %v29
    %v78 = vpack.c.b16 %v72, %v70
    %v79 = vpack.c.b16 %v73, %v71
    %v80 = vpack.c.b16 %v76, %v74
    %v81 = vpack.c.b16 %v77, %v75
    %v118 = vunpack.c.l.b16 %v30
    %v119 = vunpack.c.l.b16 %v31
    %v120 = vunpack.c.l.b16 %v32
    %v121 = vunpack.c.l.b16 %v33
    %v122 = vunpack.c.l.b16 %v34
    %v123 = vunpack.c.l.b16 %v35
    %v124 = vunpack.c.l.b16 %v36
    %v125 = vunpack.c.l.b16 %v37
    %v126 = vunpack.c.l.b16 %v38
    %v127 = vunpack.c.l.b16 %v39
    %v128 = vunpack.c.l.b16 %v40
    %v129 = vunpack.c.l.b16 %v41
    %v130 = vunpack.c.l.b16 %v42
    %v131 = vunpack.c.l.b16 %v43
    %v132 = vunpack.c.l.b16 %v44
    %v133 = vunpack.c.l.b16 %v45
    %v134 = vunpack.c.l.b16 %v46
    %v135 = vunpack.c.l.b16 %v47
    %v136 = vunpack.c.l.b16 %v48
    %v137 = vunpack.c.l.b16 %v49
    %v138 = vunpack.c.l.b16 %v50
    %v139 = vunpack.c.l.b16 %v51
    %v140 = vunpack.c.l.b16 %v52
    %v141 = vunpack.c.l.b16 %v53
    %v142 = vunpack.c.l.b16 %v54
    %v143 = vunpack.c.l.b16 %v55
    %v144 = vunpack.c.l.b16 %v56
    %v145 = vunpack.c.l.b16 %v57
    %v146 = vunpack.c.l.b16 %v58
    %v147 = vunpack.c.l.b16 %v59
    %v148 = vunpack.c.l.b16 %v60
    %v149 = vunpack.c.l.b16 %v61
    %v150 = vpack.c.b16 %v119, %v118
    %v151 = vpack.c.b16 %v121, %v120
    %v152 = vpack.c.b16 %v123, %v122
    %v153 = vpack.c.b16 %v125, %v124
    %v154 = vpack.c.b16 %v127, %v126
    %v155 = vpack.c.b16 %v129, %v128
    %v156 = vpack.c.b16 %v131, %v130
    %v157 = vpack.c.b16 %v133, %v132
    %v158 = vpack.c.b16 %v135, %v134
    %v159 = vpack.c.b16 %v137, %v136
    %v160 = vpack.c.b16 %v139, %v138
    %v161 = vpack.c.b16 %v141, %v140
    %v162 = vpack.c.b16 %v143, %v142
    %v163 = vpack.c.b16 %v145, %v144
    %v164 = vpack.c.b16 %v147, %v146
    %v165 = vpack.c.b16 %v149, %v148
    %182 = vmatpush.bf16.msra.mxu0 %v157
    %183 = vmatpush.bf16.msra.mxu0 %v156
    %184 = vmatpush.bf16.msra.mxu0 %v155
    %185 = vmatpush.bf16.msra.mxu0 %v154
    %186 = vmatpush.bf16.msra.mxu0 %v153
    %187 = vmatpush.bf16.msra.mxu0 %v152
    %188 = vmatpush.bf16.msra.mxu0 %v151
    %189 = vmatpush.bf16.msra.mxu0 %v150
    %190 = vmatmul.bf16.gmra.mxu0 %v78
    %v191 = vpop.f32.mrf.mxu0
    %v192 = vadd.f32 %v64, %v191
    %v193 = vpop.f32.mrf.mxu0
    %v194 = vadd.f32 %v64, %v193
    %195 = vmatmul.bf16.gmra.mxu0 %v80
    %v196 = vpop.f32.mrf.mxu0
    %v197 = vadd.f32 %v64, %v196
    %v198 = vpop.f32.mrf.mxu0
    %v199 = vadd.f32 %v64, %v198
    %200 = vdwg.mxu0
    %201 = vmatpush.bf16.msra.mxu0 %v165
    %202 = vmatpush.bf16.msra.mxu0 %v164
    %203 = vmatpush.bf16.msra.mxu0 %v163
    %204 = vmatpush.bf16.msra.mxu0 %v162
    %205 = vmatpush.bf16.msra.mxu0 %v161
    %206 = vmatpush.bf16.msra.mxu0 %v160
    %207 = vmatpush.bf16.msra.mxu0 %v159
    %208 = vmatpush.bf16.msra.mxu0 %v158
    %209 = vmatmul.bf16.gmra.mxu0 %v79
    %v210 = vpop.f32.mrf.mxu0
    %v211 = vadd.f32 %v192, %v210
    %v212 = vpop.f32.mrf.mxu0
    %v213 = vadd.f32 %v194, %v212
    %214 = vmatmul.bf16.gmra.mxu0 %v81
    %v215 = vpop.f32.mrf.mxu0
    %v216 = vadd.f32 %v197, %v215
    %v217 = vpop.f32.mrf.mxu0
    %v218 = vadd.f32 %v199, %v217
    %219 = vdwg.mxu0
    %v220 = vmax.f32 %v211, 0.0
    %v221 = vmax.f32 %v213, 0.0
    %v222 = vmax.f32 %v216, 0.0
    %v223 = vmax.f32 %v218, 0.0
    %v224 = vld [vmem:[#allocation2] sm:$0x3]
    %v225 = vadd.f32 %v220, %v221
    %v226 = vrot.slane %v225, 4
    %v227 = vadd.f32 %v225, %v226
    %v228 = vrot.slane %v227, 2
    %v229 = vadd.f32 %v227, %v228
    %v230 = vrot.slane %v229, 1
    %v231 = vadd.f32 %v229, %v230
    %v232 = vadd.f32 %v222, %v223
    %v233 = vrot.slane %v232, 4
    %v234 = vadd.f32 %v232, %v233
    %v235 = vrot.slane %v234, 2
    %v236 = vadd.f32 %v234, %v235
    %v237 = vrot.slane %v236, 1
    %v238 = vadd.f32 %v236, %v237
    %vm241 = vcmask 1041409
    %v242 = vsel %vm241, %v238, %v231
    %v244 = vadd.f32 %v224, %v242
    %245 = vst [vmem:[#allocation2] sm:$0x3] %v244
    // Predicated region
    $region26: #{style_encoder_forward.5} parent=1 // pred_check
      %p246 = pneg %p21
    $region27: #{style_encoder_forward.5} parent=1 // pred_check_branch
      %248 = sbr.rel (%p246) target = $region29
    $region28: #{style_encoder_forward.5} parent=1 // pred_region
      %v249 = vld [vmem:[#allocation2] sm:$0x3]
      %v250 = vmul.f32 %v249, 0.0625
      %v251 = vld [vmem:[%s3] sm:$0xff]
      %v252 = vld [vmem:[%s3 + $0x8] sm:$0xff]
      %v253 = vld [vmem:[%s3 + $0x10] sm:$0xff]
      %v254 = vld [vmem:[%s3 + $0x18] sm:$0xff]
      %v255 = vld [vmem:[%s3 + $0x20] sm:$0xff]
      %v256 = vld [vmem:[%s3 + $0x28] sm:$0xff]
      %v257 = vld [vmem:[%s3 + $0x30] sm:$0xff]
      %v258 = vld [vmem:[%s3 + $0x38] sm:$0xff]
      %v259 = vld [vmem:[%s3 + $0x40] sm:$0xff]
      %v260 = vld [vmem:[%s3 + $0x48] sm:$0xff]
      %v261 = vld [vmem:[%s3 + $0x50] sm:$0xff]
      %v262 = vld [vmem:[%s3 + $0x58] sm:$0xff]
      %v263 = vld [vmem:[%s3 + $0x60] sm:$0xff]
      %v264 = vld [vmem:[%s3 + $0x68] sm:$0xff]
      %v265 = vld [vmem:[%s3 + $0x70] sm:$0xff]
      %v266 = vld [vmem:[%s3 + $0x78] sm:$0xff]
      %v267 = vld [vmem:[%s4] sm:$0x1]
      %v269 = vperm.slane %v267, 0
      %271 = vmatpush.msra.mxu0 %v266
      %272 = vmatpush.msra.mxu0 %v265
      %273 = vmatpush.msra.mxu0 %v264
      %274 = vmatpush.msra.mxu0 %v263
      %275 = vmatpush.msra.mxu0 %v262
      %276 = vmatpush.msra.mxu0 %v261
      %277 = vmatpush.msra.mxu0 %v260
      %278 = vmatpush.msra.mxu0 %v259
      %279 = vmatpush.msra.mxu0 %v258
      %280 = vmatpush.msra.mxu0 %v257
      %281 = vmatpush.msra.mxu0 %v256
      %282 = vmatpush.msra.mxu0 %v255
      %283 = vmatpush.msra.mxu0 %v254
      %284 = vmatpush.msra.mxu0 %v253
      %285 = vmatpush.msra.mxu0 %v252
      %286 = vmatpush.msra.mxu0 %v251
      %287 = vmatmul.f32.gmra.mxu0 %v250
      %v288 = vpop.f32.mrf.mxu0
      %v289 = vadd.f32 %v269, %v288
      %290 = vdwg.mxu0
      %vm291 = vcmask 58368
      %292 = vst.msk [vmem:[#allocation3] sm:$0x3] %vm291, %v289
    $region29: #{style_encoder_forward.5} parent=1 // pred_fallthru
      _
    // Predicated region
    $region30: #{style_encoder_forward.5} parent=1 // pred_check
      _
    $region31: #{style_encoder_forward.5} parent=1 // pred_check_branch
      %294 = sbr.rel (0) target = $region33
    $region32: #{style_encoder_forward.5} parent=1 // pred_region
      %296 = vsyncadd [#allocation4], 0
      %s298 = sshll.u32 [#allocation3], 4
      %s299 = int_to_ptr.vmem [resolvable:$true] %s298
      %s300 = sshll.u32 %s5, 4
      %s301 = int_to_ptr.hbm [resolvable:$true] %s300
      %303 = dma.vmem_to_hbm [thread:$0]  %s299, 32, %s301, [#allocation4]
    $region33: #{style_encoder_forward.5} parent=1 // pred_fallthru
      _
    // Predicated region
    $region34: #{style_encoder_forward.5} parent=1 // pred_check
      _
    $region35: #{style_encoder_forward.5} parent=1 // pred_check_branch
      %305 = sbr.rel (0) target = $region37
    $region36: #{style_encoder_forward.5} parent=1 // pred_region
      %307 = dma.done [#allocation4], 32
    $region37: #{style_encoder_forward.5} parent=1 // pred_fallthru
      _
    %308 = vsyncpa [#allocation4], 1

</llo_original>
